<compile_context>
chip_gen: v7x
topology: tpu7x:2x2x1
jax: 0.10.0
libtpu: 0.0.40
codegen_flags: <defaults>
</compile_context>

<pallas_src>
import functools
import numpy as np
import jax
import jax.numpy as jnp
from jax.experimental import pallas as pl
from jax.experimental.pallas import tpu as pltpu


NEG_INF = -1e9
VMEM_LIMIT = 64 * 1024 * 1024


def _round_up(x, m):
    return ((x + m - 1) // m) * m


# ----------------------------------------------------------------------------
# Positional encoding (exact port of the numpy reference)
# ----------------------------------------------------------------------------
def _get_angles(pos, i, d_model):
    angle_rates = 1 / np.power(10000, 2 * (i // 2) / np.float32(d_model))
    return pos * angle_rates


def sinusoidal_position_encoding(num_positions, d_model):
    angles = _get_angles(np.arange(num_positions)[:, np.newaxis],
                         np.arange(d_model)[np.newaxis, :], d_model)
    sines = np.sin(angles[:, 0::2])
    cosines = np.cos(angles[:, 1::2])
    pos_encoding = np.concatenate([sines, cosines], axis=-1)[np.newaxis, ...]
    return jnp.asarray(pos_encoding, dtype=jnp.float32)


# ----------------------------------------------------------------------------
# Shared layer math (used by the Pallas kernels AND the pure-JAX reference)
# ----------------------------------------------------------------------------
def _layernorm(v, g, b):
    mu = jnp.mean(v, axis=-1, keepdims=True)
    var = jnp.mean(jnp.square(v - mu), axis=-1, keepdims=True)
    return (v - mu) * jax.lax.rsqrt(var + 1e-5) * g + b


def _mha(q_in, kv_in, w_qkv, b_qkv, w_o, b_o, bias, num_heads, recip, self_attn):
    """Multi-head attention.

    w_qkv: [D, 3D] bf16 (x@W form, [Wq|Wk|Wv]); b_qkv: [1, 3D] f32.
    w_o:   [D, D]  bf16; b_o: [1, D] f32.
    bias:  additive f32 mask broadcastable to [B, Sq, Sk].
    """
    B, Sq, D = q_in.shape
    Sk = kv_in.shape[1]
    dh = D // num_heads
    scale = 1.0 / float(np.sqrt(dh))

    q2 = q_in.reshape(B * Sq, D).astype(jnp.bfloat16)
    if self_attn:
        # single fused QKV matmul, no weight slicing on the matmul itself
        qkv = jnp.dot(q2, w_qkv, preferred_element_type=jnp.float32) + b_qkv
        q = qkv[:, :D]
        k = qkv[:, D:2 * D]
        v = qkv[:, 2 * D:]
    else:
        kv2 = kv_in.reshape(B * Sk, D).astype(jnp.bfloat16)
        q = jnp.dot(q2, w_qkv[:, :D], preferred_element_type=jnp.float32) + b_qkv[:, :D]
        kv = jnp.dot(kv2, w_qkv[:, D:], preferred_element_type=jnp.float32) + b_qkv[:, D:]
        k = kv[:, :D]
        v = kv[:, D:]

    # Single bf16 cast hoisted out of the head loop; softmax scale folded into q once.
    q3 = (q * scale).astype(jnp.bfloat16).reshape(B, Sq, D)
    k3 = k.astype(jnp.bfloat16).reshape(B, Sk, D)
    v3 = v.astype(jnp.bfloat16).reshape(B, Sk, D)
    # Mask broadcast hoisted out of the head loop (JAX does not CSE broadcast_in_dim).
    bias_full = jnp.broadcast_to(bias, (B, Sq, Sk)).astype(jnp.float32)

    # Per-head attention; each head's context is immediately projected by its row-slice of Wo
    # and accumulated -> no lane-axis concatenate of heads.
    out = jnp.zeros((B * Sq, D), jnp.float32)
    for h in range(num_heads):                      # static unroll; matmuls batched over B
        sl = slice(h * dh, (h + 1) * dh)
        s = jnp.einsum('bqd,bkd->bqk', q3[:, :, sl], k3[:, :, sl],
                       preferred_element_type=jnp.float32) + bias_full
        s = s - jnp.max(s, axis=-1, keepdims=True)
        p = jnp.exp(s)
        p = p * recip(jnp.sum(p, axis=-1, keepdims=True))
        ctx = jnp.einsum('bqk,bkd->bqd', p.astype(jnp.bfloat16), v3[:, :, sl],
                         preferred_element_type=jnp.float32)
        out = out + jnp.dot(ctx.reshape(B * Sq, dh).astype(jnp.bfloat16), w_o[sl, :],
                            preferred_element_type=jnp.float32)
    out = out + b_o
    return out.reshape(B, Sq, D)


def _ffn(x, w1, b1, w2, b2):
    B, S, D = x.shape
    h = jnp.dot(x.reshape(B * S, D).astype(jnp.bfloat16), w1,
                preferred_element_type=jnp.float32) + b1
    h = jnp.maximum(h, 0.0)
    y = jnp.dot(h.astype(jnp.bfloat16), w2,
                preferred_element_type=jnp.float32) + b2
    return y.reshape(B, S, D)


def _encoder_layer_math(x, pbias, ws, num_heads, recip):
    wqkv, bqkv, wo, bo, w1, b1, w2, b2, ln = ws
    bias = pbias[:, None, :]                              # [B, 1, Sk] key-padding bias
    # TODO(synk): dropout layers are identity (inference/eval semantics).
    attn = _mha(x, x, wqkv, bqkv, wo, bo, bias, num_heads, recip, self_attn=True)
    out1 = _layernorm(x + attn, ln[0:1], ln[1:2])
    ff = _ffn(out1, w1, b1, w2, b2)
    return _layernorm(out1 + ff, ln[2:3], ln[3:4])


def _decoder_layer_math(x, enc, amask, pbias, ws, num_heads, recip):
    (wqkv1, bqkv1, wo1, bo1, wqkv2, bqkv2, wo2, bo2,
     wf1, bf1, wf2, bf2, ln) = ws
    self_bias = amask[None, :, :]                         # [1, S_tgt, S_tgt] additive attn_mask
    cross_bias = pbias[:, None, :]                        # [B, 1, S_enc]  key-padding bias
    attn1 = _mha(x, x, wqkv1, bqkv1, wo1, bo1, self_bias, num_heads, recip, self_attn=True)
    out1 = _layernorm(x + attn1, ln[0:1], ln[1:2])
    attn2 = _mha(out1, enc, wqkv2, bqkv2, wo2, bo2, cross_bias, num_heads, recip,
                 self_attn=False)
    out2 = _layernorm(out1 + attn2, ln[2:3], ln[3:4])
    ff = _ffn(out2, wf1, bf1, wf2, bf2)
    return _layernorm(out2 + ff, ln[4:5], ln[5:6])


def _kernel_recip(d):
    return pl.reciprocal(d, approx=True)


def _ref_recip(d):
    return 1.0 / d


# ----------------------------------------------------------------------------
# Pallas kernels: one kernel == one full stack; grid axis = layer index,
# activation stream kept in VMEM scratch across layers.
# ----------------------------------------------------------------------------
_ENC_WEIGHT_KEYS = ("w_qkv", "b_qkv", "w_o", "b_o", "w1", "b1", "w2", "b2", "ln")
_DEC_WEIGHT_KEYS = ("w_qkv1", "b_qkv1", "w_o1", "b_o1", "w_qkv2", "b_qkv2",
                    "w_o2", "b_o2", "wf1", "bf1", "wf2", "bf2", "ln")


def _encoder_stack_kernel(num_heads, x_ref, pbias_ref,
                          wqkv_ref, bqkv_ref, wo_ref, bo_ref,
                          w1_ref, b1_ref, w2_ref, b2_ref, ln_ref,
                          o_ref, x_scr):
    layer = pl.program_id(0)

    @pl.when(layer == 0)
    def _():
        x_scr[...] = x_ref[...]                           # load embedded input once

    ws = (wqkv_ref[...], bqkv_ref[...], wo_ref[...], bo_ref[...],
          w1_ref[...], b1_ref[...], w2_ref[...], b2_ref[...], ln_ref[...])
    out = _encoder_layer_math(x_scr[...], pbias_ref[...], ws, num_heads, _kernel_recip)
    x_scr[...] = out                                      # f32 activation stream stays in VMEM
    o_ref[...] = out.astype(o_ref.dtype)                  # bf16; HBM writeback only at stack end


def _decoder_stack_kernel(num_heads, x_ref, enc_ref, amask_ref, pbias_ref,
                          wqkv1_ref, bqkv1_ref, wo1_ref, bo1_ref,
                          wqkv2_ref, bqkv2_ref, wo2_ref, bo2_ref,
                          wf1_ref, bf1_ref, wf2_ref, bf2_ref, ln_ref,
                          o_ref, x_scr):
    layer = pl.program_id(0)

    @pl.when(layer == 0)
    def _():
        x_scr[...] = x_ref[...]

    ws = (wqkv1_ref[...], bqkv1_ref[...], wo1_ref[...], bo1_ref[...],
          wqkv2_ref[...], bqkv2_ref[...], wo2_ref[...], bo2_ref[...],
          wf1_ref[...], bf1_ref[...], wf2_ref[...], bf2_ref[...], ln_ref[...])
    out = _decoder_layer_math(x_scr[...], enc_ref[...], amask_ref[...],
                              pbias_ref[...], ws, num_heads, _kernel_recip)
    x_scr[...] = out
    o_ref[...] = out.astype(o_ref.dtype)


def _const_spec(arr):
    n = arr.ndim
    return pl.BlockSpec(arr.shape, lambda l, _n=n: (0,) * _n)


def _layer_spec(arr):
    n = arr.ndim
    # one layer-slab per grid step; leading layer axis squeezed out in the kernel view
    return pl.BlockSpec((None,) + tuple(arr.shape[1:]),
                        lambda l, _n=n: (l,) + (0,) * (_n - 1))


def _stack_compiler_params():
    # layer axis is inherently sequential -> "arbitrary"
    return pltpu.CompilerParams(dimension_semantics=("arbitrary",),
                                vmem_limit_bytes=VMEM_LIMIT)


def encoder_stack_pallas(x, pbias, p, num_heads):
    B, S, D = x.shape
    num_layers = p["w_qkv"].shape[0]
    weights = [p[k] for k in _ENC_WEIGHT_KEYS]
    return pl.pallas_call(
        functools.partial(_encoder_stack_kernel, num_heads),
        grid=(num_layers,),
        in_specs=[_const_spec(x), _const_spec(pbias)] + [_layer_spec(w) for w in weights],
        out_specs=_const_spec(x),
        out_shape=jax.ShapeDtypeStruct((B, S, D), jnp.bfloat16),
        scratch_shapes=[pltpu.VMEM((B, S, D), jnp.float32)],
        compiler_params=_stack_compiler_params(),
    )(x, pbias, *weights)


def decoder_stack_pallas(x, enc, amask, pbias, p, num_heads):
    B, St, D = x.shape
    num_layers = p["w_qkv1"].shape[0]
    enc = enc.astype(jnp.bfloat16)                        # halve the encoder-output input DMA
    weights = [p[k] for k in _DEC_WEIGHT_KEYS]
    return pl.pallas_call(
        functools.partial(_decoder_stack_kernel, num_heads),
        grid=(num_layers,),
        in_specs=[_const_spec(x), _const_spec(enc), _const_spec(amask),
                  _const_spec(pbias)] + [_layer_spec(w) for w in weights],
        out_specs=_const_spec(x),
        out_shape=jax.ShapeDtypeStruct((B, St, D), jnp.bfloat16),
        scratch_shapes=[pltpu.VMEM((B, St, D), jnp.float32)],
        compiler_params=_stack_compiler_params(),
    )(x, enc, amask, pbias, *weights)


# Final linear: tiled over (rows, vocab) with vocab padded to a lane-dense multiple of 128.
def _final_linear_kernel(x_ref, w_ref, b_ref, o_ref):
    o_ref[...] = (jnp.dot(x_ref[...], w_ref[...],
                          preferred_element_type=jnp.float32) + b_ref[...]
                  ).astype(o_ref.dtype)


def final_linear_pallas(x, w, b, tm_max=256, tn_max=512):
    B, S, D = x.shape
    V = w.shape[1]
    M = B * S
    tm = min(_round_up(M, 8), tm_max)
    Mp = _round_up(M, tm)
    tn = min(_round_up(V, 128), tn_max)
    Vp = _round_up(V, tn)

    x2 = x.reshape(M, D).astype(jnp.bfloat16)
    if Mp != M:
        x2 = jnp.pad(x2, ((0, Mp - M), (0, 0)))
    wp = w if Vp == V else jnp.pad(w, ((0, 0), (0, Vp - V)))
    bp = b if Vp == V else jnp.pad(b, ((0, 0), (0, Vp - V)))

    out = pl.pallas_call(
        _final_linear_kernel,
        grid=(Mp // tm, Vp // tn),
        in_specs=[pl.BlockSpec((tm, D), lambda i, j: (i, 0)),
                  pl.BlockSpec((D, tn), lambda i, j: (0, j)),
                  pl.BlockSpec((1, tn), lambda i, j: (0, j))],
        out_specs=pl.BlockSpec((tm, tn), lambda i, j: (i, j)),
        out_shape=jax.ShapeDtypeStruct((Mp, Vp), jnp.float32),
        compiler_params=pltpu.CompilerParams(
            dimension_semantics=("parallel", "parallel"),
            vmem_limit_bytes=VMEM_LIMIT),
    )(x2, wp, bp)
    return out[:M, :V].reshape(B, S, V)


# ----------------------------------------------------------------------------
# Pure-JAX references (same math, exact reciprocal) for validation.
# ----------------------------------------------------------------------------
def encoder_stack_ref(x, pbias, p, num_heads):
    for l in range(p["w_qkv"].shape[0]):
        ws = tuple(p[k][l] for k in _ENC_WEIGHT_KEYS)
        x = _encoder_layer_math(x, pbias, ws, num_heads, _ref_recip)
    return x


def decoder_stack_ref(x, enc, amask, pbias, p, num_heads):
    for l in range(p["w_qkv1"].shape[0]):
        ws = tuple(p[k][l] for k in _DEC_WEIGHT_KEYS)
        x = _decoder_layer_math(x, enc, amask, pbias, ws, num_heads, _ref_recip)
    return x


def final_linear_ref(x, w, b):
    B, S, D = x.shape
    y = jnp.dot(x.reshape(B * S, D).astype(jnp.bfloat16), w,
                preferred_element_type=jnp.float32) + b
    return y.reshape(B, S, -1)


# ----------------------------------------------------------------------------
# Deterministic parameter init (shapes match the PyTorch module; packed + layer-stacked)
# ----------------------------------------------------------------------------
def _mha_params(key, d_model):
    k = jax.random.split(key, 4)
    in_w = jax.random.normal(k[0], (3 * d_model, d_model), jnp.float32) * 0.05
    in_b = jax.random.normal(k[1], (3 * d_model,), jnp.float32) * 0.01
    out_w = jax.random.normal(k[2], (d_model, d_model), jnp.float32) * 0.05
    out_b = jax.random.normal(k[3], (d_model,), jnp.float32) * 0.01
    # pre-transpose to x@W form and pack [Wq|Wk|Wv] -> [D, 3D]
    w_qkv = jnp.concatenate([in_w[:d_model].T, in_w[d_model:2 * d_model].T,
                             in_w[2 * d_model:].T], axis=1)
    return (w_qkv.astype(jnp.bfloat16), in_b[None].astype(jnp.float32),
            out_w.T.astype(jnp.bfloat16), out_b[None].astype(jnp.float32))


def _ffn_params(key, d_model, d_ff):
    k = jax.random.split(key, 4)
    w1 = jax.random.normal(k[0], (d_ff, d_model), jnp.float32) * 0.05
    b1 = jax.random.normal(k[1], (d_ff,), jnp.float32) * 0.01
    w2 = jax.random.normal(k[2], (d_model, d_ff), jnp.float32) * 0.05
    b2 = jax.random.normal(k[3], (d_model,), jnp.float32) * 0.01
    return (w1.T.astype(jnp.bfloat16), b1[None].astype(jnp.float32),
            w2.T.astype(jnp.bfloat16), b2[None].astype(jnp.float32))


def _layernorm_slab(n_norms, d_model):
    rows = []
    for _ in range(n_norms):
        rows.append(jnp.ones((1, d_model), jnp.float32))     # gamma
        rows.append(jnp.zeros((1, d_model), jnp.float32))    # beta
    return jnp.concatenate(rows, axis=0)


def _encoder_layer_params(key, d_model, d_ff):
    k = jax.random.split(key, 2)
    w_qkv, b_qkv, w_o, b_o = _mha_params(k[0], d_model)
    w1, b1, w2, b2 = _ffn_params(k[1], d_model, d_ff)
    return dict(w_qkv=w_qkv, b_qkv=b_qkv, w_o=w_o, b_o=b_o,
                w1=w1, b1=b1, w2=w2, b2=b2, ln=_layernorm_slab(2, d_model))


def _decoder_layer_params(key, d_model, d_ff):
    k = jax.random.split(key, 3)
    w_qkv1, b_qkv1, w_o1, b_o1 = _mha_params(k[0], d_model)
    w_qkv2, b_qkv2, w_o2, b_o2 = _mha_params(k[1], d_model)
    wf1, bf1, wf2, bf2 = _ffn_params(k[2], d_model, d_ff)
    return dict(w_qkv1=w_qkv1, b_qkv1=b_qkv1, w_o1=w_o1, b_o1=b_o1,
                w_qkv2=w_qkv2, b_qkv2=b_qkv2, w_o2=w_o2, b_o2=b_o2,
                wf1=wf1, bf1=bf1, wf2=wf2, bf2=bf2, ln=_layernorm_slab(3, d_model))


def _stack_layers(layer_dicts):
    return {k: jnp.stack([d[k] for d in layer_dicts]) for k in layer_dicts[0]}


def init_transformer_params(key, num_layers, d_model, d_ff, input_vocab, target_vocab,
                            max_pos_enc, max_pos_dec):
    k = jax.random.split(key, 4 + 2 * num_layers)
    enc_stack = _stack_layers([_encoder_layer_params(k[4 + i], d_model, d_ff)
                               for i in range(num_layers)])
    dec_stack = _stack_layers([_decoder_layer_params(k[4 + num_layers + i], d_model, d_ff)
                               for i in range(num_layers)])
    final_w = jax.random.normal(k[2], (target_vocab, d_model), jnp.float32) * 0.05
    final_b = jax.random.normal(k[3], (target_vocab,), jnp.float32) * 0.01
    encoder = dict(embedding=jax.random.normal(k[0], (input_vocab, d_model), jnp.float32) * 0.1,
                   pos_encoding=sinusoidal_position_encoding(max_pos_enc, d_model),
                   **enc_stack)
    decoder = dict(embedding=jax.random.normal(k[1], (target_vocab, d_model), jnp.float32) * 0.1,
                   pos_encoding=sinusoidal_position_encoding(max_pos_dec, d_model),
                   **dec_stack)
    return {"encoder": encoder, "decoder": decoder,
            "final_w": final_w.T.astype(jnp.bfloat16),       # [D, V], x@W form
            "final_b": final_b[None].astype(jnp.float32)}    # [1, V]


# ----------------------------------------------------------------------------
# Full Transformer forward (embedding / pos-enc glue in JAX, stacks in Pallas)
# ----------------------------------------------------------------------------
def _embed(params, ids):
    d_model = params["embedding"].shape[1]
    x = jnp.take(params["embedding"], ids, axis=0) * jnp.sqrt(jnp.float32(d_model))
    x = x + params["pos_encoding"][:, :ids.shape[1], :]
    # TODO(synk): nn.Dropout is identity here (eval-mode semantics).
    return x


def encoder_forward(params, ids, padding_mask, num_heads, use_pallas=True):
    x = _embed(params, ids)
    pbias = jnp.where(padding_mask, NEG_INF, 0.0).astype(jnp.float32)   # [B, S_enc]
    if use_pallas:
        return encoder_stack_pallas(x, pbias, params, num_heads)
    return encoder_stack_ref(x, pbias, params, num_heads)


def decoder_forward(params, ids, enc_out, look_ahead_mask, padding_mask, attn_mask,
                    num_heads, use_pallas=True):
    del look_ahead_mask   # unused — the PyTorch DecoderLayer ignores look_ahead_mask
    x = _embed(params, ids)
    pbias = jnp.where(padding_mask, NEG_INF, 0.0).astype(jnp.float32)   # [B, S_enc]
    amask = attn_mask.astype(jnp.float32)                               # [S_tgt, S_tgt]
    if use_pallas:
        return decoder_stack_pallas(x, enc_out, amask, pbias, params, num_heads)
    return decoder_stack_ref(x, enc_out, amask, pbias, params, num_heads)


def transformer_forward(params, inp_ids, tgt_ids, enc_padding_mask, look_ahead_mask,
                        dec_padding_mask, attn_mask, num_heads, use_pallas=True):
    enc_out = encoder_forward(params["encoder"], inp_ids, enc_padding_mask,
                              num_heads, use_pallas)
    dec_out = decoder_forward(params["decoder"], tgt_ids, enc_out, look_ahead_mask,
                              dec_padding_mask, attn_mask, num_heads, use_pallas)
    if use_pallas:
        return final_linear_pallas(dec_out, params["final_w"], params["final_b"])
    return final_linear_ref(dec_out, params["final_w"], params["final_b"])


if __name__ == "__main__":
    # small shapes consistent with the module
    B, S_IN, S_TGT = 2, 8, 8
    D, H, DFF = 32, 4, 64
    IN_VOCAB, TGT_VOCAB, NUM_LAYERS, MAX_POS = 50, 60, 2, 16

    key = jax.random.PRNGKey(0)
    kp, kin, ktgt = jax.random.split(key, 3)

    params = init_transformer_params(kp, NUM_LAYERS, D, DFF, IN_VOCAB, TGT_VOCAB,
                                     MAX_POS, MAX_POS)
    inp_ids = jax.random.randint(kin, (B, S_IN), 0, IN_VOCAB)
    tgt_ids = jax.random.randint(ktgt, (B, S_TGT), 0, TGT_VOCAB)

    # key_padding_mask (True = ignore): pad out the last 2 encoder positions of batch 1
    enc_padding_mask = jnp.zeros((B, S_IN), bool).at[1, S_IN - 2:].set(True)
    dec_padding_mask = enc_padding_mask          # cross-attn keys are encoder positions
    # causal additive attn_mask for decoder self-attention (PyTorch-style float mask)
    attn_mask = jnp.where(jnp.triu(jnp.ones((S_TGT, S_TGT), bool), k=1),
                          NEG_INF, 0.0).astype(jnp.float32)
    look_ahead_mask = None                       # unused by the PyTorch module's forward

    out = transformer_forward(params, inp_ids, tgt_ids, enc_padding_mask,
                              look_ahead_mask, dec_padding_mask, attn_mask, H,
                              use_pallas=True)
    out = jax.block_until_ready(out)

    ref = transformer_forward(params, inp_ids, tgt_ids, enc_padding_mask,
                              look_ahead_mask, dec_padding_mask, attn_mask, H,
                              use_pallas=False)

    assert out.shape == (B, S_TGT, TGT_VOCAB)
    assert bool(jnp.all(jnp.isfinite(out)))
    assert jnp.allclose(out, ref, atol=2e-2, rtol=2e-2), \
        "Pallas output mismatch vs JAX reference"

    print("KERNEL_OK")
</pallas_src>

<mosaic_0001>
module attributes {stable_mosaic.version = 11 : i64} {
  func.func @_encoder_stack_kernel(%arg0: i32, %arg1: memref<2x8x32xf32, #tpu.memory_space<vmem>>, %arg2: memref<2x8xf32, #tpu.memory_space<vmem>>, %arg3: memref<1x32x96xbf16, #tpu.memory_space<vmem>>, %arg4: memref<1x1x96xf32, #tpu.memory_space<vmem>>, %arg5: memref<1x32x32xbf16, #tpu.memory_space<vmem>>, %arg6: memref<1x1x32xf32, #tpu.memory_space<vmem>>, %arg7: memref<1x32x64xbf16, #tpu.memory_space<vmem>>, %arg8: memref<1x1x64xf32, #tpu.memory_space<vmem>>, %arg9: memref<1x64x32xbf16, #tpu.memory_space<vmem>>, %arg10: memref<1x1x32xf32, #tpu.memory_space<vmem>>, %arg11: memref<1x4x32xf32, #tpu.memory_space<vmem>>, %arg12: memref<2x8x32xbf16, #tpu.memory_space<vmem>>, %arg13: memref<2x8x32xf32, #tpu.memory_space<vmem>>) attributes {dimension_semantics = [#tpu.dimension_semantics<arbitrary>], iteration_bounds = array<i64: 2>, scalar_prefetch = 0 : i64, scratch_operands = 1 : i64, tpu.core_type = #tpu.core_type<tc>, window_params = [{pipeline_mode = #tpu.pipeline_mode<synchronous>, transform_indices = @transform_0, window_bounds = array<i64: 2, 8, 32>}, {pipeline_mode = #tpu.pipeline_mode<synchronous>, transform_indices = @transform_1, window_bounds = array<i64: 2, 8>}, {transform_indices = @transform_2, window_bounds = array<i64: 1, 32, 96>}, {transform_indices = @transform_3, window_bounds = array<i64: 1, 1, 96>}, {transform_indices = @transform_4, window_bounds = array<i64: 1, 32, 32>}, {transform_indices = @transform_5, window_bounds = array<i64: 1, 1, 32>}, {transform_indices = @transform_6, window_bounds = array<i64: 1, 32, 64>}, {transform_indices = @transform_7, window_bounds = array<i64: 1, 1, 64>}, {transform_indices = @transform_8, window_bounds = array<i64: 1, 64, 32>}, {transform_indices = @transform_9, window_bounds = array<i64: 1, 1, 32>}, {transform_indices = @transform_10, window_bounds = array<i64: 1, 4, 32>}, {pipeline_mode = #tpu.pipeline_mode<synchronous>, transform_indices = @transform_11, window_bounds = array<i64: 2, 8, 32>}]} {
    %c0_i32 = arith.constant 0 : i32
    %0 = arith.cmpi eq, %arg0, %c0_i32 : i32
    %1 = arith.extui %0 : i1 to i32
    %c0_i32_0 = arith.constant 0 : i32
    %2 = arith.cmpi ne, %1, %c0_i32_0 : i32
    scf.if %2 {
      %c0_73 = arith.constant 0 : index
      %c0_74 = arith.constant 0 : index
      %c0_75 = arith.constant 0 : index
      %203 = vector.load %arg1[%c0_73, %c0_74, %c0_75] : memref<2x8x32xf32, #tpu.memory_space<vmem>>, vector<2x8x32xf32>
      %c0_76 = arith.constant 0 : index
      %c0_77 = arith.constant 0 : index
      %c0_78 = arith.constant 0 : index
      %204 = vector.load %arg13[%c0_76, %c0_77, %c0_78] : memref<2x8x32xf32, #tpu.memory_space<vmem>>, vector<2x8x32xf32>
      tpu.vector_store %arg13[%c0_76, %c0_77, %c0_78], %203 {strides = array<i32>} : memref<2x8x32xf32, #tpu.memory_space<vmem>>, vector<2x8x32xf32>,
    } else {
    }
    %c0 = arith.constant 0 : index
    %c0_1 = arith.constant 0 : index
    %c0_2 = arith.constant 0 : index
    %3 = vector.load %arg3[%c0, %c0_1, %c0_2] : memref<1x32x96xbf16, #tpu.memory_space<vmem>>, vector<1x32x96xbf16>
    %4 = vector.shape_cast %3 : vector<1x32x96xbf16> to vector<32x96xbf16>
    %c0_3 = arith.constant 0 : index
    %c0_4 = arith.constant 0 : index
    %c0_5 = arith.constant 0 : index
    %5 = vector.load %arg4[%c0_3, %c0_4, %c0_5] : memref<1x1x96xf32, #tpu.memory_space<vmem>>, vector<1x1x96xf32>
    %6 = vector.shape_cast %5 : vector<1x1x96xf32> to vector<1x96xf32>
    %c0_6 = arith.constant 0 : index
    %c0_7 = arith.constant 0 : index
    %c0_8 = arith.constant 0 : index
    %7 = vector.load %arg5[%c0_6, %c0_7, %c0_8] : memref<1x32x32xbf16, #tpu.memory_space<vmem>>, vector<1x32x32xbf16>
    %8 = vector.shape_cast %7 : vector<1x32x32xbf16> to vector<32x32xbf16>
    %c0_9 = arith.constant 0 : index
    %c0_10 = arith.constant 0 : index
    %c0_11 = arith.constant 0 : index
    %9 = vector.load %arg6[%c0_9, %c0_10, %c0_11] : memref<1x1x32xf32, #tpu.memory_space<vmem>>, vector<1x1x32xf32>
    %10 = vector.shape_cast %9 : vector<1x1x32xf32> to vector<1x32xf32>
    %c0_12 = arith.constant 0 : index
    %c0_13 = arith.constant 0 : index
    %c0_14 = arith.constant 0 : index
    %11 = vector.load %arg7[%c0_12, %c0_13, %c0_14] : memref<1x32x64xbf16, #tpu.memory_space<vmem>>, vector<1x32x64xbf16>
    %12 = vector.shape_cast %11 : vector<1x32x64xbf16> to vector<32x64xbf16>
    %c0_15 = arith.constant 0 : index
    %c0_16 = arith.constant 0 : index
    %c0_17 = arith.constant 0 : index
    %13 = vector.load %arg8[%c0_15, %c0_16, %c0_17] : memref<1x1x64xf32, #tpu.memory_space<vmem>>, vector<1x1x64xf32>
    %14 = vector.shape_cast %13 : vector<1x1x64xf32> to vector<1x64xf32>
    %c0_18 = arith.constant 0 : index
    %c0_19 = arith.constant 0 : index
    %c0_20 = arith.constant 0 : index
    %15 = vector.load %arg9[%c0_18, %c0_19, %c0_20] : memref<1x64x32xbf16, #tpu.memory_space<vmem>>, vector<1x64x32xbf16>
    %16 = vector.shape_cast %15 : vector<1x64x32xbf16> to vector<64x32xbf16>
    %c0_21 = arith.constant 0 : index
    %c0_22 = arith.constant 0 : index
    %c0_23 = arith.constant 0 : index
    %17 = vector.load %arg10[%c0_21, %c0_22, %c0_23] : memref<1x1x32xf32, #tpu.memory_space<vmem>>, vector<1x1x32xf32>
    %18 = vector.shape_cast %17 : vector<1x1x32xf32> to vector<1x32xf32>
    %c0_24 = arith.constant 0 : index
    %c0_25 = arith.constant 0 : index
    %c0_26 = arith.constant 0 : index
    %19 = vector.load %arg11[%c0_24, %c0_25, %c0_26] : memref<1x4x32xf32, #tpu.memory_space<vmem>>, vector<1x4x32xf32>
    %20 = vector.shape_cast %19 : vector<1x4x32xf32> to vector<4x32xf32>
    %c0_27 = arith.constant 0 : index
    %c0_28 = arith.constant 0 : index
    %c0_29 = arith.constant 0 : index
    %21 = vector.load %arg13[%c0_27, %c0_28, %c0_29] : memref<2x8x32xf32, #tpu.memory_space<vmem>>, vector<2x8x32xf32>
    %c0_30 = arith.constant 0 : index
    %c0_31 = arith.constant 0 : index
    %22 = vector.load %arg2[%c0_30, %c0_31] : memref<2x8xf32, #tpu.memory_space<vmem>>, vector<2x8xf32>
    %23 = vector.shape_cast %22 : vector<2x8xf32> to vector<2x1x8xf32>
    %24 = vector.shape_cast %21 : vector<2x8x32xf32> to vector<16x32xf32>
    %25 = arith.truncf %24 : vector<16x32xf32> to vector<16x32xbf16>
    %cst = arith.constant dense<0.000000e+00> : vector<16x96xf32>
    %26 = tpu.matmul %25, %4, %cst {dimension_numbers = #tpu.dot_dimension_numbers<[1], [0], [0], [1], [0, 0, 1, 1], [], []>} : vector<16x32xbf16>, vector<32x96xbf16>, vector<16x96xf32> -> vector<16x96xf32>
    %27 = vector.broadcast %6 : vector<1x96xf32> to vector<16x96xf32>
    %28 = arith.addf %26, %27 : vector<16x96xf32>
    %29 = vector.extract_strided_slice %28 {offsets = [0, 0], sizes = [16, 32], strides = [1, 1]} : vector<16x96xf32> to vector<16x32xf32>
    %30 = vector.extract_strided_slice %28 {offsets = [0, 32], sizes = [16, 32], strides = [1, 1]} : vector<16x96xf32> to vector<16x32xf32>
    %31 = vector.extract_strided_slice %28 {offsets = [0, 64], sizes = [16, 32], strides = [1, 1]} : vector<16x96xf32> to vector<16x32xf32>
    %cst_32 = arith.constant 0.353553385 : f32
    %32 = vector.broadcast %cst_32 : f32 to vector<16x32xf32>
    %33 = arith.mulf %29, %32 : vector<16x32xf32>
    %34 = arith.truncf %33 : vector<16x32xf32> to vector<16x32xbf16>
    %35 = vector.shape_cast %34 : vector<16x32xbf16> to vector<2x8x32xbf16>
    %36 = arith.truncf %30 : vector<16x32xf32> to vector<16x32xbf16>
    %37 = vector.shape_cast %36 : vector<16x32xbf16> to vector<2x8x32xbf16>
    %38 = arith.truncf %31 : vector<16x32xf32> to vector<16x32xbf16>
    %39 = vector.shape_cast %38 : vector<16x32xbf16> to vector<2x8x32xbf16>
    %40 = vector.shape_cast %23 : vector<2x1x8xf32> to vector<2x1x8xf32>
    %41 = vector.broadcast %40 : vector<2x1x8xf32> to vector<2x8x8xf32>
    %cst_33 = arith.constant 0.000000e+00 : f32
    %42 = vector.broadcast %cst_33 : f32 to vector<16x32xf32>
    %43 = vector.extract_strided_slice %35 {offsets = [0, 0, 0], sizes = [2, 8, 8], strides = [1, 1, 1]} : vector<2x8x32xbf16> to vector<2x8x8xbf16>
    %44 = vector.extract_strided_slice %37 {offsets = [0, 0, 0], sizes = [2, 8, 8], strides = [1, 1, 1]} : vector<2x8x32xbf16> to vector<2x8x8xbf16>
    "tpu.trace_start"() <{level = 10 : i32, message = "bqd,bkd->bqk"}> : () -> ()
    %cst_34 = arith.constant dense<0.000000e+00> : vector<2x8x8xf32>
    %45 = tpu.matmul %43, %44, %cst_34 {dimension_numbers = #tpu.dot_dimension_numbers<[2], [2], [1], [1], [0, 0, 0, 1, 1, 1], [0], [0]>} : vector<2x8x8xbf16>, vector<2x8x8xbf16>, vector<2x8x8xf32> -> vector<2x8x8xf32>
    "tpu.trace_stop"() : () -> ()
    %46 = arith.addf %45, %41 : vector<2x8x8xf32>
    %cst_35 = arith.constant dense<0xFF800000> : vector<2x8xf32>
    %47 = vector.multi_reduction <maximumf>, %46, %cst_35 [2] : vector<2x8x8xf32> to vector<2x8xf32>
    %48 = vector.shape_cast %47 : vector<2x8xf32> to vector<2x8x1xf32>
    %49 = vector.broadcast %48 : vector<2x8x1xf32> to vector<2x8x8xf32>
    %50 = arith.subf %46, %49 : vector<2x8x8xf32>
    %51 = math.exp %50 : vector<2x8x8xf32>
    %cst_36 = arith.constant dense<0.000000e+00> : vector<2x8xf32>
    %52 = vector.multi_reduction <add>, %51, %cst_36 [2] : vector<2x8x8xf32> to vector<2x8xf32>
    %53 = vector.shape_cast %52 : vector<2x8xf32> to vector<2x8x1xf32>
    %54 = tpu.reciprocal %53 {approx = true} : vector<2x8x1xf32> -> vector<2x8x1xf32>
    %55 = vector.broadcast %54 : vector<2x8x1xf32> to vector<2x8x8xf32>
    %56 = arith.mulf %51, %55 : vector<2x8x8xf32>
    %57 = arith.truncf %56 : vector<2x8x8xf32> to vector<2x8x8xbf16>
    %58 = vector.extract_strided_slice %39 {offsets = [0, 0, 0], sizes = [2, 8, 8], strides = [1, 1, 1]} : vector<2x8x32xbf16> to vector<2x8x8xbf16>
    "tpu.trace_start"() <{level = 10 : i32, message = "bqk,bkd->bqd"}> : () -> ()
    %cst_37 = arith.constant dense<0.000000e+00> : vector<2x8x8xf32>
    %59 = tpu.matmul %57, %58, %cst_37 {dimension_numbers = #tpu.dot_dimension_numbers<[2], [1], [1], [2], [0, 0, 0, 1, 1, 2], [0], [0]>} : vector<2x8x8xbf16>, vector<2x8x8xbf16>, vector<2x8x8xf32> -> vector<2x8x8xf32>
    "tpu.trace_stop"() : () -> ()
    %60 = vector.shape_cast %59 : vector<2x8x8xf32> to vector<16x8xf32>
    %61 = arith.truncf %60 : vector<16x8xf32> to vector<16x8xbf16>
    %62 = vector.extract_strided_slice %8 {offsets = [0, 0], sizes = [8, 32], strides = [1, 1]} : vector<32x32xbf16> to vector<8x32xbf16>
    %cst_38 = arith.constant dense<0.000000e+00> : vector<16x32xf32>
    %63 = tpu.matmul %61, %62, %cst_38 {dimension_numbers = #tpu.dot_dimension_numbers<[1], [0], [0], [1], [0, 0, 1, 1], [], []>} : vector<16x8xbf16>, vector<8x32xbf16>, vector<16x32xf32> -> vector<16x32xf32>
    %64 = arith.addf %42, %63 : vector<16x32xf32>
    %65 = vector.extract_strided_slice %35 {offsets = [0, 0, 8], sizes = [2, 8, 8], strides = [1, 1, 1]} : vector<2x8x32xbf16> to vector<2x8x8xbf16>
    %66 = vector.extract_strided_slice %37 {offsets = [0, 0, 8], sizes = [2, 8, 8], strides = [1, 1, 1]} : vector<2x8x32xbf16> to vector<2x8x8xbf16>
    "tpu.trace_start"() <{level = 10 : i32, message = "bqd,bkd->bqk"}> : () -> ()
    %cst_39 = arith.constant dense<0.000000e+00> : vector<2x8x8xf32>
    %67 = tpu.matmul %65, %66, %cst_39 {dimension_numbers = #tpu.dot_dimension_numbers<[2], [2], [1], [1], [0, 0, 0, 1, 1, 1], [0], [0]>} : vector<2x8x8xbf16>, vector<2x8x8xbf16>, vector<2x8x8xf32> -> vector<2x8x8xf32>
    "tpu.trace_stop"() : () -> ()
    %68 = arith.addf %67, %41 : vector<2x8x8xf32>
    %cst_40 = arith.constant dense<0xFF800000> : vector<2x8xf32>
    %69 = vector.multi_reduction <maximumf>, %68, %cst_40 [2] : vector<2x8x8xf32> to vector<2x8xf32>
    %70 = vector.shape_cast %69 : vector<2x8xf32> to vector<2x8x1xf32>
    %71 = vector.broadcast %70 : vector<2x8x1xf32> to vector<2x8x8xf32>
    %72 = arith.subf %68, %71 : vector<2x8x8xf32>
    %73 = math.exp %72 : vector<2x8x8xf32>
    %cst_41 = arith.constant dense<0.000000e+00> : vector<2x8xf32>
    %74 = vector.multi_reduction <add>, %73, %cst_41 [2] : vector<2x8x8xf32> to vector<2x8xf32>
    %75 = vector.shape_cast %74 : vector<2x8xf32> to vector<2x8x1xf32>
    %76 = tpu.reciprocal %75 {approx = true} : vector<2x8x1xf32> -> vector<2x8x1xf32>
    %77 = vector.broadcast %76 : vector<2x8x1xf32> to vector<2x8x8xf32>
    %78 = arith.mulf %73, %77 : vector<2x8x8xf32>
    %79 = arith.truncf %78 : vector<2x8x8xf32> to vector<2x8x8xbf16>
    %80 = vector.extract_strided_slice %39 {offsets = [0, 0, 8], sizes = [2, 8, 8], strides = [1, 1, 1]} : vector<2x8x32xbf16> to vector<2x8x8xbf16>
    "tpu.trace_start"() <{level = 10 : i32, message = "bqk,bkd->bqd"}> : () -> ()
    %cst_42 = arith.constant dense<0.000000e+00> : vector<2x8x8xf32>
    %81 = tpu.matmul %79, %80, %cst_42 {dimension_numbers = #tpu.dot_dimension_numbers<[2], [1], [1], [2], [0, 0, 0, 1, 1, 2], [0], [0]>} : vector<2x8x8xbf16>, vector<2x8x8xbf16>, vector<2x8x8xf32> -> vector<2x8x8xf32>
    "tpu.trace_stop"() : () -> ()
    %82 = vector.shape_cast %81 : vector<2x8x8xf32> to vector<16x8xf32>
    %83 = arith.truncf %82 : vector<16x8xf32> to vector<16x8xbf16>
    %84 = vector.extract_strided_slice %8 {offsets = [8, 0], sizes = [8, 32], strides = [1, 1]} : vector<32x32xbf16> to vector<8x32xbf16>
    %cst_43 = arith.constant dense<0.000000e+00> : vector<16x32xf32>
    %85 = tpu.matmul %83, %84, %cst_43 {dimension_numbers = #tpu.dot_dimension_numbers<[1], [0], [0], [1], [0, 0, 1, 1], [], []>} : vector<16x8xbf16>, vector<8x32xbf16>, vector<16x32xf32> -> vector<16x32xf32>
    %86 = arith.addf %64, %85 : vector<16x32xf32>
    %87 = vector.extract_strided_slice %35 {offsets = [0, 0, 16], sizes = [2, 8, 8], strides = [1, 1, 1]} : vector<2x8x32xbf16> to vector<2x8x8xbf16>
    %88 = vector.extract_strided_slice %37 {offsets = [0, 0, 16], sizes = [2, 8, 8], strides = [1, 1, 1]} : vector<2x8x32xbf16> to vector<2x8x8xbf16>
    "tpu.trace_start"() <{level = 10 : i32, message = "bqd,bkd->bqk"}> : () -> ()
    %cst_44 = arith.constant dense<0.000000e+00> : vector<2x8x8xf32>
    %89 = tpu.matmul %87, %88, %cst_44 {dimension_numbers = #tpu.dot_dimension_numbers<[2], [2], [1], [1], [0, 0, 0, 1, 1, 1], [0], [0]>} : vector<2x8x8xbf16>, vector<2x8x8xbf16>, vector<2x8x8xf32> -> vector<2x8x8xf32>
    "tpu.trace_stop"() : () -> ()
    %90 = arith.addf %89, %41 : vector<2x8x8xf32>
    %cst_45 = arith.constant dense<0xFF800000> : vector<2x8xf32>
    %91 = vector.multi_reduction <maximumf>, %90, %cst_45 [2] : vector<2x8x8xf32> to vector<2x8xf32>
    %92 = vector.shape_cast %91 : vector<2x8xf32> to vector<2x8x1xf32>
    %93 = vector.broadcast %92 : vector<2x8x1xf32> to vector<2x8x8xf32>
    %94 = arith.subf %90, %93 : vector<2x8x8xf32>
    %95 = math.exp %94 : vector<2x8x8xf32>
    %cst_46 = arith.constant dense<0.000000e+00> : vector<2x8xf32>
    %96 = vector.multi_reduction <add>, %95, %cst_46 [2] : vector<2x8x8xf32> to vector<2x8xf32>
    %97 = vector.shape_cast %96 : vector<2x8xf32> to vector<2x8x1xf32>
    %98 = tpu.reciprocal %97 {approx = true} : vector<2x8x1xf32> -> vector<2x8x1xf32>
    %99 = vector.broadcast %98 : vector<2x8x1xf32> to vector<2x8x8xf32>
    %100 = arith.mulf %95, %99 : vector<2x8x8xf32>
    %101 = arith.truncf %100 : vector<2x8x8xf32> to vector<2x8x8xbf16>
    %102 = vector.extract_strided_slice %39 {offsets = [0, 0, 16], sizes = [2, 8, 8], strides = [1, 1, 1]} : vector<2x8x32xbf16> to vector<2x8x8xbf16>
    "tpu.trace_start"() <{level = 10 : i32, message = "bqk,bkd->bqd"}> : () -> ()
    %cst_47 = arith.constant dense<0.000000e+00> : vector<2x8x8xf32>
    %103 = tpu.matmul %101, %102, %cst_47 {dimension_numbers = #tpu.dot_dimension_numbers<[2], [1], [1], [2], [0, 0, 0, 1, 1, 2], [0], [0]>} : vector<2x8x8xbf16>, vector<2x8x8xbf16>, vector<2x8x8xf32> -> vector<2x8x8xf32>
    "tpu.trace_stop"() : () -> ()
    %104 = vector.shape_cast %103 : vector<2x8x8xf32> to vector<16x8xf32>
    %105 = arith.truncf %104 : vector<16x8xf32> to vector<16x8xbf16>
    %106 = vector.extract_strided_slice %8 {offsets = [16, 0], sizes = [8, 32], strides = [1, 1]} : vector<32x32xbf16> to vector<8x32xbf16>
    %cst_48 = arith.constant dense<0.000000e+00> : vector<16x32xf32>
    %107 = tpu.matmul %105, %106, %cst_48 {dimension_numbers = #tpu.dot_dimension_numbers<[1], [0], [0], [1], [0, 0, 1, 1], [], []>} : vector<16x8xbf16>, vector<8x32xbf16>, vector<16x32xf32> -> vector<16x32xf32>
    %108 = arith.addf %86, %107 : vector<16x32xf32>
    %109 = vector.extract_strided_slice %35 {offsets = [0, 0, 24], sizes = [2, 8, 8], strides = [1, 1, 1]} : vector<2x8x32xbf16> to vector<2x8x8xbf16>
    %110 = vector.extract_strided_slice %37 {offsets = [0, 0, 24], sizes = [2, 8, 8], strides = [1, 1, 1]} : vector<2x8x32xbf16> to vector<2x8x8xbf16>
    "tpu.trace_start"() <{level = 10 : i32, message = "bqd,bkd->bqk"}> : () -> ()
    %cst_49 = arith.constant dense<0.000000e+00> : vector<2x8x8xf32>
    %111 = tpu.matmul %109, %110, %cst_49 {dimension_numbers = #tpu.dot_dimension_numbers<[2], [2], [1], [1], [0, 0, 0, 1, 1, 1], [0], [0]>} : vector<2x8x8xbf16>, vector<2x8x8xbf16>, vector<2x8x8xf32> -> vector<2x8x8xf32>
    "tpu.trace_stop"() : () -> ()
    %112 = arith.addf %111, %41 : vector<2x8x8xf32>
    %cst_50 = arith.constant dense<0xFF800000> : vector<2x8xf32>
    %113 = vector.multi_reduction <maximumf>, %112, %cst_50 [2] : vector<2x8x8xf32> to vector<2x8xf32>
    %114 = vector.shape_cast %113 : vector<2x8xf32> to vector<2x8x1xf32>
    %115 = vector.broadcast %114 : vector<2x8x1xf32> to vector<2x8x8xf32>
    %116 = arith.subf %112, %115 : vector<2x8x8xf32>
    %117 = math.exp %116 : vector<2x8x8xf32>
    %cst_51 = arith.constant dense<0.000000e+00> : vector<2x8xf32>
    %118 = vector.multi_reduction <add>, %117, %cst_51 [2] : vector<2x8x8xf32> to vector<2x8xf32>
    %119 = vector.shape_cast %118 : vector<2x8xf32> to vector<2x8x1xf32>
    %120 = tpu.reciprocal %119 {approx = true} : vector<2x8x1xf32> -> vector<2x8x1xf32>
    %121 = vector.broadcast %120 : vector<2x8x1xf32> to vector<2x8x8xf32>
    %122 = arith.mulf %117, %121 : vector<2x8x8xf32>
    %123 = arith.truncf %122 : vector<2x8x8xf32> to vector<2x8x8xbf16>
    %124 = vector.extract_strided_slice %39 {offsets = [0, 0, 24], sizes = [2, 8, 8], strides = [1, 1, 1]} : vector<2x8x32xbf16> to vector<2x8x8xbf16>
    "tpu.trace_start"() <{level = 10 : i32, message = "bqk,bkd->bqd"}> : () -> ()
    %cst_52 = arith.constant dense<0.000000e+00> : vector<2x8x8xf32>
    %125 = tpu.matmul %123, %124, %cst_52 {dimension_numbers = #tpu.dot_dimension_numbers<[2], [1], [1], [2], [0, 0, 0, 1, 1, 2], [0], [0]>} : vector<2x8x8xbf16>, vector<2x8x8xbf16>, vector<2x8x8xf32> -> vector<2x8x8xf32>
    "tpu.trace_stop"() : () -> ()
    %126 = vector.shape_cast %125 : vector<2x8x8xf32> to vector<16x8xf32>
    %127 = arith.truncf %126 : vector<16x8xf32> to vector<16x8xbf16>
    %128 = vector.extract_strided_slice %8 {offsets = [24, 0], sizes = [8, 32], strides = [1, 1]} : vector<32x32xbf16> to vector<8x32xbf16>
    %cst_53 = arith.constant dense<0.000000e+00> : vector<16x32xf32>
    %129 = tpu.matmul %127, %128, %cst_53 {dimension_numbers = #tpu.dot_dimension_numbers<[1], [0], [0], [1], [0, 0, 1, 1], [], []>} : vector<16x8xbf16>, vector<8x32xbf16>, vector<16x32xf32> -> vector<16x32xf32>
    %130 = arith.addf %108, %129 : vector<16x32xf32>
    %131 = vector.broadcast %10 : vector<1x32xf32> to vector<16x32xf32>
    %132 = arith.addf %130, %131 : vector<16x32xf32>
    %133 = vector.shape_cast %132 : vector<16x32xf32> to vector<2x8x32xf32>
    %134 = arith.addf %21, %133 : vector<2x8x32xf32>
    %135 = vector.extract_strided_slice %20 {offsets = [0, 0], sizes = [1, 32], strides = [1, 1]} : vector<4x32xf32> to vector<1x32xf32>
    %136 = vector.extract_strided_slice %20 {offsets = [1, 0], sizes = [1, 32], strides = [1, 1]} : vector<4x32xf32> to vector<1x32xf32>
    %cst_54 = arith.constant dense<0.000000e+00> : vector<2x8xf32>
    %137 = vector.multi_reduction <add>, %134, %cst_54 [2] : vector<2x8x32xf32> to vector<2x8xf32>
    %138 = vector.shape_cast %137 : vector<2x8xf32> to vector<2x8x1xf32>
    %cst_55 = arith.constant 3.200000e+01 : f32
    %139 = vector.broadcast %cst_55 : f32 to vector<2x8x1xf32>
    %140 = arith.divf %138, %139 : vector<2x8x1xf32>
    %141 = vector.broadcast %140 : vector<2x8x1xf32> to vector<2x8x32xf32>
    %142 = arith.subf %134, %141 : vector<2x8x32xf32>
    %143 = arith.mulf %142, %142 : vector<2x8x32xf32>
    %cst_56 = arith.constant dense<0.000000e+00> : vector<2x8xf32>
    %144 = vector.multi_reduction <add>, %143, %cst_56 [2] : vector<2x8x32xf32> to vector<2x8xf32>
    %145 = vector.shape_cast %144 : vector<2x8xf32> to vector<2x8x1xf32>
    %cst_57 = arith.constant 3.200000e+01 : f32
    %146 = vector.broadcast %cst_57 : f32 to vector<2x8x1xf32>
    %147 = arith.divf %145, %146 : vector<2x8x1xf32>
    %148 = vector.broadcast %140 : vector<2x8x1xf32> to vector<2x8x32xf32>
    %149 = arith.subf %134, %148 : vector<2x8x32xf32>
    %cst_58 = arith.constant 9.99999974E-6 : f32
    %150 = vector.broadcast %cst_58 : f32 to vector<2x8x1xf32>
    %151 = arith.addf %147, %150 : vector<2x8x1xf32>
    %152 = math.rsqrt %151 : vector<2x8x1xf32>
    %153 = vector.broadcast %152 : vector<2x8x1xf32> to vector<2x8x32xf32>
    %154 = arith.mulf %149, %153 : vector<2x8x32xf32>
    %155 = vector.shape_cast %135 : vector<1x32xf32> to vector<1x1x32xf32>
    %156 = vector.broadcast %155 : vector<1x1x32xf32> to vector<2x8x32xf32>
    %157 = arith.mulf %154, %156 : vector<2x8x32xf32>
    %158 = vector.shape_cast %136 : vector<1x32xf32> to vector<1x1x32xf32>
    %159 = vector.broadcast %158 : vector<1x1x32xf32> to vector<2x8x32xf32>
    %160 = arith.addf %157, %159 : vector<2x8x32xf32>
    %161 = vector.shape_cast %160 : vector<2x8x32xf32> to vector<16x32xf32>
    %162 = arith.truncf %161 : vector<16x32xf32> to vector<16x32xbf16>
    %cst_59 = arith.constant dense<0.000000e+00> : vector<16x64xf32>
    %163 = tpu.matmul %162, %12, %cst_59 {dimension_numbers = #tpu.dot_dimension_numbers<[1], [0], [0], [1], [0, 0, 1, 1], [], []>} : vector<16x32xbf16>, vector<32x64xbf16>, vector<16x64xf32> -> vector<16x64xf32>
    %164 = vector.broadcast %14 : vector<1x64xf32> to vector<16x64xf32>
    %165 = arith.addf %163, %164 : vector<16x64xf32>
    %cst_60 = arith.constant 0.000000e+00 : f32
    %166 = vector.broadcast %cst_60 : f32 to vector<16x64xf32>
    %167 = arith.maximumf %165, %166 : vector<16x64xf32>
    %168 = arith.truncf %167 : vector<16x64xf32> to vector<16x64xbf16>
    %cst_61 = arith.constant dense<0.000000e+00> : vector<16x32xf32>
    %169 = tpu.matmul %168, %16, %cst_61 {dimension_numbers = #tpu.dot_dimension_numbers<[1], [0], [0], [1], [0, 0, 1, 1], [], []>} : vector<16x64xbf16>, vector<64x32xbf16>, vector<16x32xf32> -> vector<16x32xf32>
    %170 = vector.broadcast %18 : vector<1x32xf32> to vector<16x32xf32>
    %171 = arith.addf %169, %170 : vector<16x32xf32>
    %172 = vector.shape_cast %171 : vector<16x32xf32> to vector<2x8x32xf32>
    %173 = arith.addf %160, %172 : vector<2x8x32xf32>
    %174 = vector.extract_strided_slice %20 {offsets = [2, 0], sizes = [1, 32], strides = [1, 1]} : vector<4x32xf32> to vector<1x32xf32>
    %175 = vector.extract_strided_slice %20 {offsets = [3, 0], sizes = [1, 32], strides = [1, 1]} : vector<4x32xf32> to vector<1x32xf32>
    %cst_62 = arith.constant dense<0.000000e+00> : vector<2x8xf32>
    %176 = vector.multi_reduction <add>, %173, %cst_62 [2] : vector<2x8x32xf32> to vector<2x8xf32>
    %177 = vector.shape_cast %176 : vector<2x8xf32> to vector<2x8x1xf32>
    %cst_63 = arith.constant 3.200000e+01 : f32
    %178 = vector.broadcast %cst_63 : f32 to vector<2x8x1xf32>
    %179 = arith.divf %177, %178 : vector<2x8x1xf32>
    %180 = vector.broadcast %179 : vector<2x8x1xf32> to vector<2x8x32xf32>
    %181 = arith.subf %173, %180 : vector<2x8x32xf32>
    %182 = arith.mulf %181, %181 : vector<2x8x32xf32>
    %cst_64 = arith.constant dense<0.000000e+00> : vector<2x8xf32>
    %183 = vector.multi_reduction <add>, %182, %cst_64 [2] : vector<2x8x32xf32> to vector<2x8xf32>
    %184 = vector.shape_cast %183 : vector<2x8xf32> to vector<2x8x1xf32>
    %cst_65 = arith.constant 3.200000e+01 : f32
    %185 = vector.broadcast %cst_65 : f32 to vector<2x8x1xf32>
    %186 = arith.divf %184, %185 : vector<2x8x1xf32>
    %187 = vector.broadcast %179 : vector<2x8x1xf32> to vector<2x8x32xf32>
    %188 = arith.subf %173, %187 : vector<2x8x32xf32>
    %cst_66 = arith.constant 9.99999974E-6 : f32
    %189 = vector.broadcast %cst_66 : f32 to vector<2x8x1xf32>
    %190 = arith.addf %186, %189 : vector<2x8x1xf32>
    %191 = math.rsqrt %190 : vector<2x8x1xf32>
    %192 = vector.broadcast %191 : vector<2x8x1xf32> to vector<2x8x32xf32>
    %193 = arith.mulf %188, %192 : vector<2x8x32xf32>
    %194 = vector.shape_cast %174 : vector<1x32xf32> to vector<1x1x32xf32>
    %195 = vector.broadcast %194 : vector<1x1x32xf32> to vector<2x8x32xf32>
    %196 = arith.mulf %193, %195 : vector<2x8x32xf32>
    %197 = vector.shape_cast %175 : vector<1x32xf32> to vector<1x1x32xf32>
    %198 = vector.broadcast %197 : vector<1x1x32xf32> to vector<2x8x32xf32>
    %199 = arith.addf %196, %198 : vector<2x8x32xf32>
    %c0_67 = arith.constant 0 : index
    %c0_68 = arith.constant 0 : index
    %c0_69 = arith.constant 0 : index
    %200 = vector.load %arg13[%c0_67, %c0_68, %c0_69] : memref<2x8x32xf32, #tpu.memory_space<vmem>>, vector<2x8x32xf32>
    tpu.vector_store %arg13[%c0_67, %c0_68, %c0_69], %199 {strides = array<i32>} : memref<2x8x32xf32, #tpu.memory_space<vmem>>, vector<2x8x32xf32>,
    %201 = arith.truncf %199 : vector<2x8x32xf32> to vector<2x8x32xbf16>
    %c0_70 = arith.constant 0 : index
    %c0_71 = arith.constant 0 : index
    %c0_72 = arith.constant 0 : index
    %202 = vector.load %arg12[%c0_70, %c0_71, %c0_72] : memref<2x8x32xbf16, #tpu.memory_space<vmem>>, vector<2x8x32xbf16>
    tpu.vector_store %arg12[%c0_70, %c0_71, %c0_72], %201 {strides = array<i32>} : memref<2x8x32xbf16, #tpu.memory_space<vmem>>, vector<2x8x32xbf16>,
    return
  }
  func.func @transform_0(%arg0: i32) -> (i32, i32, i32) {
    %c0_i32 = arith.constant 0 : i32
    %c0_i32_0 = arith.constant 0 : i32
    %c0_i32_1 = arith.constant 0 : i32
    %c0_i32_2 = arith.constant 0 : i32
    return %c0_i32, %c0_i32_0, %c0_i32_1 : i32, i32, i32
  }
  func.func @transform_1(%arg0: i32) -> (i32, i32) {
    %c0_i32 = arith.constant 0 : i32
    %c0_i32_0 = arith.constant 0 : i32
    %c0_i32_1 = arith.constant 0 : i32
    return %c0_i32, %c0_i32_0 : i32, i32
  }
  func.func @transform_2(%arg0: i32) -> (i32, i32, i32) {
    %c0_i32 = arith.constant 0 : i32
    %c0_i32_0 = arith.constant 0 : i32
    %c0_i32_1 = arith.constant 0 : i32
    return %arg0, %c0_i32, %c0_i32_0 : i32, i32, i32
  }
  func.func @transform_3(%arg0: i32) -> (i32, i32, i32) {
    %c0_i32 = arith.constant 0 : i32
    %c0_i32_0 = arith.constant 0 : i32
    %c0_i32_1 = arith.constant 0 : i32
    return %arg0, %c0_i32, %c0_i32_0 : i32, i32, i32
  }
  func.func @transform_4(%arg0: i32) -> (i32, i32, i32) {
    %c0_i32 = arith.constant 0 : i32
    %c0_i32_0 = arith.constant 0 : i32
    %c0_i32_1 = arith.constant 0 : i32
    return %arg0, %c0_i32, %c0_i32_0 : i32, i32, i32
  }
  func.func @transform_5(%arg0: i32) -> (i32, i32, i32) {
    %c0_i32 = arith.constant 0 : i32
    %c0_i32_0 = arith.constant 0 : i32
    %c0_i32_1 = arith.constant 0 : i32
    return %arg0, %c0_i32, %c0_i32_0 : i32, i32, i32
  }
  func.func @transform_6(%arg0: i32) -> (i32, i32, i32) {
    %c0_i32 = arith.constant 0 : i32
    %c0_i32_0 = arith.constant 0 : i32
    %c0_i32_1 = arith.constant 0 : i32
    return %arg0, %c0_i32, %c0_i32_0 : i32, i32, i32
  }
  func.func @transform_7(%arg0: i32) -> (i32, i32, i32) {
    %c0_i32 = arith.constant 0 : i32
    %c0_i32_0 = arith.constant 0 : i32
    %c0_i32_1 = arith.constant 0 : i32
    return %arg0, %c0_i32, %c0_i32_0 : i32, i32, i32
  }
  func.func @transform_8(%arg0: i32) -> (i32, i32, i32) {
    %c0_i32 = arith.constant 0 : i32
    %c0_i32_0 = arith.constant 0 : i32
    %c0_i32_1 = arith.constant 0 : i32
    return %arg0, %c0_i32, %c0_i32_0 : i32, i32, i32
  }
  func.func @transform_9(%arg0: i32) -> (i32, i32, i32) {
    %c0_i32 = arith.constant 0 : i32
    %c0_i32_0 = arith.constant 0 : i32
    %c0_i32_1 = arith.constant 0 : i32
    return %arg0, %c0_i32, %c0_i32_0 : i32, i32, i32
  }
  func.func @transform_10(%arg0: i32) -> (i32, i32, i32) {
    %c0_i32 = arith.constant 0 : i32
    %c0_i32_0 = arith.constant 0 : i32
    %c0_i32_1 = arith.constant 0 : i32
    return %arg0, %c0_i32, %c0_i32_0 : i32, i32, i32
  }
  func.func @transform_11(%arg0: i32) -> (i32, i32, i32) {
    %c0_i32 = arith.constant 0 : i32
    %c0_i32_0 = arith.constant 0 : i32
    %c0_i32_1 = arith.constant 0 : i32
    %c0_i32_2 = arith.constant 0 : i32
    return %c0_i32, %c0_i32_0, %c0_i32_1 : i32, i32, i32
  }
}

</mosaic_0001>

<llo_original>
// kernel: tpu_custom_call.1
$region0: #{tpu_custom_call.1}
  #allocation0 [shape = 'u32[]', space=smem, size = 0x4, offset = 0x4, fixed_abs, tag = 'smem constant byte address 0x4 - core index']
  #allocation1 [shape = 'u32[144,128]{1,0:T(1,128)}', space=vmem, size = 0x12000, scoped, tag = 'internal scratch']
  #allocation2 [shape = 'f32[2,8,32]{2,1,0:T(8,128)}', space=vmem, size = 0x2000, scoped, tag = 'scratch operand']
  %s0 = inlined_call_operand.hbm [shape: f32[2,8,32], index: 0, kind: input, shape index: {}]
  %s1 = inlined_call_operand.hbm [shape: f32[2,8], index: 1, kind: input, shape index: {}]
  %s2 = inlined_call_operand.hbm [shape: bf16[2,32,96], index: 2, kind: input, shape index: {}]
  %s3 = inlined_call_operand.hbm [shape: f32[2,1,96], index: 3, kind: input, shape index: {}]
  %s4 = inlined_call_operand.hbm [shape: bf16[2,32,32], index: 4, kind: input, shape index: {}]
  %s5 = inlined_call_operand.hbm [shape: f32[2,1,32], index: 5, kind: input, shape index: {}]
  %s6 = inlined_call_operand.hbm [shape: bf16[2,32,64], index: 6, kind: input, shape index: {}]
  %s7 = inlined_call_operand.hbm [shape: f32[2,1,64], index: 7, kind: input, shape index: {}]
  %s8 = inlined_call_operand.hbm [shape: bf16[2,64,32], index: 8, kind: input, shape index: {}]
  %s9 = inlined_call_operand.hbm [shape: f32[2,1,32], index: 9, kind: input, shape index: {}]
  %s10 = inlined_call_operand.hbm [shape: f32[2,4,32], index: 10, kind: input, shape index: {}]
  %s11 = inlined_call_operand.hbm [shape: bf16[2,8,32], index: 11, kind: output, shape index: {}]
  %s12 = sld [smem:[#allocation0]]
  $region125: #{tpu_custom_call.1} parent=0
    _
  %s14 = ssub.s32 1, %s12
  %s15 = scalar_select 0, %s14, %s12
  $region1: #{tpu_custom_call.1} parent=0
    #allocation3 [shape = 'u8[8192]{0}', space=vmem, size = 0x2000, scoped, tag = 'input window, operand 0, single buffered']
    #allocation4 [shape = 's32[2]{0}', space=sflag, size = 0x8, scoped, tag = 'scoped memory for tpu_custom_call.1']
    #allocation5 [shape = 's32[2]{0}', space=sflag, size = 0x8, scoped, tag = 'scoped memory for tpu_custom_call.1']
    #allocation6 [shape = 'u8[1024]{0}', space=vmem, size = 0x400, scoped, tag = 'input window, operand 1, single buffered']
    #allocation7 [shape = 's32[1]{0}', space=sflag, size = 0x4, scoped, tag = 'scoped memory for tpu_custom_call.1']
    #allocation8 [shape = 'u8[16384]{0}', space=vmem, size = 0x4000, scoped, tag = 'input window, operand 2']
    #allocation9 [shape = 'u8[1024]{0}', space=vmem, size = 0x400, scoped, tag = 'input window, operand 3']
    #allocation10 [shape = 'u8[16384]{0}', space=vmem, size = 0x4000, scoped, tag = 'input window, operand 4']
    #allocation11 [shape = 'u8[1024]{0}', space=vmem, size = 0x400, scoped, tag = 'input window, operand 5']
    #allocation12 [shape = 'u8[16384]{0}', space=vmem, size = 0x4000, scoped, tag = 'input window, operand 6']
    #allocation13 [shape = 'u8[1024]{0}', space=vmem, size = 0x400, scoped, tag = 'input window, operand 7']
    #allocation14 [shape = 'u8[32768]{0}', space=vmem, size = 0x8000, scoped, tag = 'input window, operand 8']
    #allocation15 [shape = 'u8[1024]{0}', space=vmem, size = 0x400, scoped, tag = 'input window, operand 9']
    #allocation16 [shape = 'u8[4096]{0}', space=vmem, size = 0x1000, scoped, tag = 'input window, operand 10']
    #allocation17 [shape = 'u8[4096]{0}', space=vmem, size = 0x1000, scoped, tag = 'output window, operand 0, single buffered']
    %16 = vsyncpa [#allocation4], 0
    %17 = vsyncpa [#allocation7], 0
    %18 = vsyncpa [#allocation5], 0
    loop: start=0, step=1, limit=4
    $region2: #{tpu_custom_call.1} parent=1 // loop_pre_header
      _
    $region3: #{tpu_custom_call.1} parent=1 // loop_header
      %s20 = sphi 0, %s24
      %p21 = scmp.ge.s32.totalorder %s20, 4
      %s28 = sphi 0, %s28
      %s30 = sphi 0, %s28
      %s31 = sphi 0, %s30
      %s45 = sphi 0, %s31
      %s49 = sphi 0, %s49
      %s51 = sphi 0, %s49
      %s52 = sphi 0, %s51
      %s66 = sphi 0, %s52
      %s72 = sphi 0, %s74
      %s75 = sphi 0, %s72
      %s76 = sphi 0, %s75
      %s92 = sphi 0, %s76
      %s98 = sphi 0, %s100
      %s101 = sphi 0, %s98
      %s102 = sphi 0, %s101
      %s118 = sphi 0, %s102
      %s124 = sphi 0, %s126
      %s127 = sphi 0, %s124
      %s128 = sphi 0, %s127
      %s144 = sphi 0, %s128
      %s150 = sphi 0, %s152
      %s153 = sphi 0, %s150
      %s154 = sphi 0, %s153
      %s170 = sphi 0, %s154
      %s176 = sphi 0, %s178
      %s179 = sphi 0, %s176
      %s180 = sphi 0, %s179
      %s196 = sphi 0, %s180
      %s202 = sphi 0, %s204
      %s205 = sphi 0, %s202
      %s206 = sphi 0, %s205
      %s222 = sphi 0, %s206
      %s228 = sphi 0, %s230
      %s231 = sphi 0, %s228
      %s232 = sphi 0, %s231
      %s248 = sphi 0, %s232
      %s254 = sphi 0, %s256
      %s257 = sphi 0, %s254
      %s258 = sphi 0, %s257
      %s274 = sphi 0, %s258
      %s280 = sphi 0, %s282
      %s283 = sphi 0, %s280
      %s284 = sphi 0, %s283
      %s300 = sphi 0, %s284
      %s304 = sphi 0, %s304
      %s306 = sphi 0, %s304
      %s307 = sphi 0, %s306
      %s321 = sphi 0, %s307
    $region4: #{tpu_custom_call.1} parent=1 // loop_header_branch
      %23 = sbr.rel (%p21) target = $region8
    $region5: #{tpu_custom_call.1} parent=1 // loop_body
      %s25 = ssub.s32 %s20, 1
      %s26 = ssub.s32 %s20, 2
      %s27 = sadd.s32 %s20, 1
      %s29 = sadd.s32 %s28, 1
      %p32 = scmp.eq.s32.totalorder %s20, 1
      %p33 = scmp.ne.s32.totalorder %s28, %s30
      %p34 = scmp.eq.s32.totalorder %s20, 0
      %p35 = por %p33, %p34
      %p36 = scmp.ne.s32.totalorder %s28, %s30
      %p37 = scmp.eq.s32.totalorder %s25, 1
      %p38 = por %p36, %p37
      %p39 = scmp.ne.s32.totalorder %s30, %s31
      %p40 = scmp.eq.s32.totalorder %s25, 0
      %p41 = por %p39, %p40
      %p42 = scmp.ne.s32.totalorder %s30, %s31
      %p43 = scmp.eq.s32.totalorder %s26, 1
      %p44 = por %p42, %p43
      %p46 = scmp.ne.s32.totalorder %s31, %s45
      %p47 = scmp.eq.s32.totalorder %s26, 0
      %p48 = por %p46, %p47
      %s50 = sadd.s32 %s49, 1
      %p53 = scmp.eq.s32.totalorder %s20, 1
      %p54 = scmp.ne.s32.totalorder %s49, %s51
      %p55 = scmp.eq.s32.totalorder %s20, 0
      %p56 = por %p54, %p55
      %p57 = scmp.ne.s32.totalorder %s49, %s51
      %p58 = scmp.eq.s32.totalorder %s25, 1
      %p59 = por %p57, %p58
      %p60 = scmp.ne.s32.totalorder %s51, %s52
      %p61 = scmp.eq.s32.totalorder %s25, 0
      %p62 = por %p60, %p61
      %p63 = scmp.ne.s32.totalorder %s51, %s52
      %p64 = scmp.eq.s32.totalorder %s26, 1
      %p65 = por %p63, %p64
      %p67 = scmp.ne.s32.totalorder %s52, %s66
      %p68 = scmp.eq.s32.totalorder %s26, 0
      %p69 = por %p67, %p68
      %s70 = ssub.s32 %s20, %s27
      %p71 = scmp.eq.s32.totalorder %s70, 0
      %s73 = sadd.s32 %s72, 1
      %s74 = scalar_select %p71, %s72, %s73
      %p77 = pneg %p71
      %p78 = scmp.eq.s32.totalorder %s20, 1
      %p79 = por %p77, %p78
      %p80 = scmp.ne.s32.totalorder %s72, %s75
      %p81 = scmp.eq.s32.totalorder %s20, 0
      %p82 = por %p80, %p81
      %p83 = scmp.ne.s32.totalorder %s72, %s75
      %p84 = scmp.eq.s32.totalorder %s25, 1
      %p85 = por %p83, %p84
      %p86 = scmp.ne.s32.totalorder %s75, %s76
      %p87 = scmp.eq.s32.totalorder %s25, 0
      %p88 = por %p86, %p87
      %p89 = scmp.ne.s32.totalorder %s75, %s76
      %p90 = scmp.eq.s32.totalorder %s26, 1
      %p91 = por %p89, %p90
      %p93 = scmp.ne.s32.totalorder %s76, %s92
      %p94 = scmp.eq.s32.totalorder %s26, 0
      %p95 = por %p93, %p94
      %s96 = ssub.s32 %s20, %s27
      %p97 = scmp.eq.s32.totalorder %s96, 0
      %s99 = sadd.s32 %s98, 1
      %s100 = scalar_select %p97, %s98, %s99
      %p103 = pneg %p97
      %p104 = scmp.eq.s32.totalorder %s20, 1
      %p105 = por %p103, %p104
      %p106 = scmp.ne.s32.totalorder %s98, %s101
      %p107 = scmp.eq.s32.totalorder %s20, 0
      %p108 = por %p106, %p107
      %p109 = scmp.ne.s32.totalorder %s98, %s101
      %p110 = scmp.eq.s32.totalorder %s25, 1
      %p111 = por %p109, %p110
      %p112 = scmp.ne.s32.totalorder %s101, %s102
      %p113 = scmp.eq.s32.totalorder %s25, 0
      %p114 = por %p112, %p113
      %p115 = scmp.ne.s32.totalorder %s101, %s102
      %p116 = scmp.eq.s32.totalorder %s26, 1
      %p117 = por %p115, %p116
      %p119 = scmp.ne.s32.totalorder %s102, %s118
      %p120 = scmp.eq.s32.totalorder %s26, 0
      %p121 = por %p119, %p120
      %s122 = ssub.s32 %s20, %s27
      %p123 = scmp.eq.s32.totalorder %s122, 0
      %s125 = sadd.s32 %s124, 1
      %s126 = scalar_select %p123, %s124, %s125
      %p129 = pneg %p123
      %p130 = scmp.eq.s32.totalorder %s20, 1
      %p131 = por %p129, %p130
      %p132 = scmp.ne.s32.totalorder %s124, %s127
      %p133 = scmp.eq.s32.totalorder %s20, 0
      %p134 = por %p132, %p133
      %p135 = scmp.ne.s32.totalorder %s124, %s127
      %p136 = scmp.eq.s32.totalorder %s25, 1
      %p137 = por %p135, %p136
      %p138 = scmp.ne.s32.totalorder %s127, %s128
      %p139 = scmp.eq.s32.totalorder %s25, 0
      %p140 = por %p138, %p139
      %p141 = scmp.ne.s32.totalorder %s127, %s128
      %p142 = scmp.eq.s32.totalorder %s26, 1
      %p143 = por %p141, %p142
      %p145 = scmp.ne.s32.totalorder %s128, %s144
      %p146 = scmp.eq.s32.totalorder %s26, 0
      %p147 = por %p145, %p146
      %s148 = ssub.s32 %s20, %s27
      %p149 = scmp.eq.s32.totalorder %s148, 0
      %s151 = sadd.s32 %s150, 1
      %s152 = scalar_select %p149, %s150, %s151
      %p155 = pneg %p149
      %p156 = scmp.eq.s32.totalorder %s20, 1
      %p157 = por %p155, %p156
      %p158 = scmp.ne.s32.totalorder %s150, %s153
      %p159 = scmp.eq.s32.totalorder %s20, 0
      %p160 = por %p158, %p159
      %p161 = scmp.ne.s32.totalorder %s150, %s153
      %p162 = scmp.eq.s32.totalorder %s25, 1
      %p163 = por %p161, %p162
      %p164 = scmp.ne.s32.totalorder %s153, %s154
      %p165 = scmp.eq.s32.totalorder %s25, 0
      %p166 = por %p164, %p165
      %p167 = scmp.ne.s32.totalorder %s153, %s154
      %p168 = scmp.eq.s32.totalorder %s26, 1
      %p169 = por %p167, %p168
      %p171 = scmp.ne.s32.totalorder %s154, %s170
      %p172 = scmp.eq.s32.totalorder %s26, 0
      %p173 = por %p171, %p172
      %s174 = ssub.s32 %s20, %s27
      %p175 = scmp.eq.s32.totalorder %s174, 0
      %s177 = sadd.s32 %s176, 1
      %s178 = scalar_select %p175, %s176, %s177
      %p181 = pneg %p175
      %p182 = scmp.eq.s32.totalorder %s20, 1
      %p183 = por %p181, %p182
      %p184 = scmp.ne.s32.totalorder %s176, %s179
      %p185 = scmp.eq.s32.totalorder %s20, 0
      %p186 = por %p184, %p185
      %p187 = scmp.ne.s32.totalorder %s176, %s179
      %p188 = scmp.eq.s32.totalorder %s25, 1
      %p189 = por %p187, %p188
      %p190 = scmp.ne.s32.totalorder %s179, %s180
      %p191 = scmp.eq.s32.totalorder %s25, 0
      %p192 = por %p190, %p191
      %p193 = scmp.ne.s32.totalorder %s179, %s180
      %p194 = scmp.eq.s32.totalorder %s26, 1
      %p195 = por %p193, %p194
      %p197 = scmp.ne.s32.totalorder %s180, %s196
      %p198 = scmp.eq.s32.totalorder %s26, 0
      %p199 = por %p197, %p198
      %s200 = ssub.s32 %s20, %s27
      %p201 = scmp.eq.s32.totalorder %s200, 0
      %s203 = sadd.s32 %s202, 1
      %s204 = scalar_select %p201, %s202, %s203
      %p207 = pneg %p201
      %p208 = scmp.eq.s32.totalorder %s20, 1
      %p209 = por %p207, %p208
      %p210 = scmp.ne.s32.totalorder %s202, %s205
      %p211 = scmp.eq.s32.totalorder %s20, 0
      %p212 = por %p210, %p211
      %p213 = scmp.ne.s32.totalorder %s202, %s205
      %p214 = scmp.eq.s32.totalorder %s25, 1
      %p215 = por %p213, %p214
      %p216 = scmp.ne.s32.totalorder %s205, %s206
      %p217 = scmp.eq.s32.totalorder %s25, 0
      %p218 = por %p216, %p217
      %p219 = scmp.ne.s32.totalorder %s205, %s206
      %p220 = scmp.eq.s32.totalorder %s26, 1
      %p221 = por %p219, %p220
      %p223 = scmp.ne.s32.totalorder %s206, %s222
      %p224 = scmp.eq.s32.totalorder %s26, 0
      %p225 = por %p223, %p224
      %s226 = ssub.s32 %s20, %s27
      %p227 = scmp.eq.s32.totalorder %s226, 0
      %s229 = sadd.s32 %s228, 1
      %s230 = scalar_select %p227, %s228, %s229
      %p233 = pneg %p227
      %p234 = scmp.eq.s32.totalorder %s20, 1
      %p235 = por %p233, %p234
      %p236 = scmp.ne.s32.totalorder %s228, %s231
      %p237 = scmp.eq.s32.totalorder %s20, 0
      %p238 = por %p236, %p237
      %p239 = scmp.ne.s32.totalorder %s228, %s231
      %p240 = scmp.eq.s32.totalorder %s25, 1
      %p241 = por %p239, %p240
      %p242 = scmp.ne.s32.totalorder %s231, %s232
      %p243 = scmp.eq.s32.totalorder %s25, 0
      %p244 = por %p242, %p243
      %p245 = scmp.ne.s32.totalorder %s231, %s232
      %p246 = scmp.eq.s32.totalorder %s26, 1
      %p247 = por %p245, %p246
      %p249 = scmp.ne.s32.totalorder %s232, %s248
      %p250 = scmp.eq.s32.totalorder %s26, 0
      %p251 = por %p249, %p250
      %s252 = ssub.s32 %s20, %s27
      %p253 = scmp.eq.s32.totalorder %s252, 0
      %s255 = sadd.s32 %s254, 1
      %s256 = scalar_select %p253, %s254, %s255
      %p259 = pneg %p253
      %p260 = scmp.eq.s32.totalorder %s20, 1
      %p261 = por %p259, %p260
      %p262 = scmp.ne.s32.totalorder %s254, %s257
      %p263 = scmp.eq.s32.totalorder %s20, 0
      %p264 = por %p262, %p263
      %p265 = scmp.ne.s32.totalorder %s254, %s257
      %p266 = scmp.eq.s32.totalorder %s25, 1
      %p267 = por %p265, %p266
      %p268 = scmp.ne.s32.totalorder %s257, %s258
      %p269 = scmp.eq.s32.totalorder %s25, 0
      %p270 = por %p268, %p269
      %p271 = scmp.ne.s32.totalorder %s257, %s258
      %p272 = scmp.eq.s32.totalorder %s26, 1
      %p273 = por %p271, %p272
      %p275 = scmp.ne.s32.totalorder %s258, %s274
      %p276 = scmp.eq.s32.totalorder %s26, 0
      %p277 = por %p275, %p276
      %s278 = ssub.s32 %s20, %s27
      %p279 = scmp.eq.s32.totalorder %s278, 0
      %s281 = sadd.s32 %s280, 1
      %s282 = scalar_select %p279, %s280, %s281
      %p285 = pneg %p279
      %p286 = scmp.eq.s32.totalorder %s20, 1
      %p287 = por %p285, %p286
      %p288 = scmp.ne.s32.totalorder %s280, %s283
      %p289 = scmp.eq.s32.totalorder %s20, 0
      %p290 = por %p288, %p289
      %p291 = scmp.ne.s32.totalorder %s280, %s283
      %p292 = scmp.eq.s32.totalorder %s25, 1
      %p293 = por %p291, %p292
      %p294 = scmp.ne.s32.totalorder %s283, %s284
      %p295 = scmp.eq.s32.totalorder %s25, 0
      %p296 = por %p294, %p295
      %p297 = scmp.ne.s32.totalorder %s283, %s284
      %p298 = scmp.eq.s32.totalorder %s26, 1
      %p299 = por %p297, %p298
      %p301 = scmp.ne.s32.totalorder %s284, %s300
      %p302 = scmp.eq.s32.totalorder %s26, 0
      %p303 = por %p301, %p302
      %s305 = sadd.s32 %s304, 1
      %p308 = scmp.eq.s32.totalorder %s20, 1
      %p309 = scmp.ne.s32.totalorder %s304, %s306
      %p310 = scmp.eq.s32.totalorder %s20, 0
      %p311 = por %p309, %p310
      %p312 = scmp.ne.s32.totalorder %s304, %s306
      %p313 = scmp.eq.s32.totalorder %s25, 1
      %p314 = por %p312, %p313
      %p315 = scmp.ne.s32.totalorder %s306, %s307
      %p316 = scmp.eq.s32.totalorder %s25, 0
      %p317 = por %p315, %p316
      %p318 = scmp.ne.s32.totalorder %s306, %s307
      %p319 = scmp.eq.s32.totalorder %s26, 1
      %p320 = por %p318, %p319
      %p322 = scmp.ne.s32.totalorder %s307, %s321
      %p323 = scmp.eq.s32.totalorder %s26, 0
      %p324 = por %p322, %p323
      %p325 = scmp.le.s32.totalorder 1, %s20
      %p326 = scmp.lt.s32.totalorder %s20, 3
      %p327 = pnand %p325, %p326
      %p328 = pneg %p327
      // Predicated region
      $region9: #{tpu_custom_call.1} parent=5 // pred_check
        _
      $region10: #{tpu_custom_call.1} parent=5 // pred_check_branch
        %330 = sbr.rel (%p327) target = $region12
      $region11: #{tpu_custom_call.1} parent=5 // pred_region
        %s331 = ssub.s32 %s20, 1
        // Predicated region
        $region13: #{tpu_custom_call.1} parent=11 // pred_check
          %p332 = pneg %p41
        $region14: #{tpu_custom_call.1} parent=11 // pred_check_branch
          %334 = sbr.rel (%p332) target = $region16
        $region15: #{tpu_custom_call.1} parent=11 // pred_region
          %s336 = ssub.s32 256, 256
          %337 = vsyncadd [#allocation4], %s336
          %s338 = sshll.u32 [#allocation3], 4
          %s339 = int_to_ptr.vmem [resolvable:$true] %s338
          %344 = dma.hbm_to_vmem [thread:$0]  %s0, 256, %s339, [#allocation4], 128, 128, 8
        $region16: #{tpu_custom_call.1} parent=11 // pred_fallthru
          _
        // Predicated region
        $region17: #{tpu_custom_call.1} parent=11 // pred_check
          %p345 = pneg %p62
        $region18: #{tpu_custom_call.1} parent=11 // pred_check_branch
          %347 = sbr.rel (%p345) target = $region20
        $region19: #{tpu_custom_call.1} parent=11 // pred_region
          %s349 = ssub.s32 32, 32
          %350 = vsyncadd [#allocation7], %s349
          %s352 = sshll.u32 [#allocation6], 4
          %s353 = int_to_ptr.vmem [resolvable:$true] %s352
          %355 = dma.hbm_to_vmem [thread:$0]  %s1, 32, %s353, [#allocation7]
        $region20: #{tpu_custom_call.1} parent=11 // pred_fallthru
          _
      $region12: #{tpu_custom_call.1} parent=5 // pred_fallthru
        _
      %p356 = scmp.lt.s32.totalorder %s20, 2
      // Predicated region
      $region21: #{tpu_custom_call.1} parent=5 // pred_check
        %p357 = pneg %p356
      $region22: #{tpu_custom_call.1} parent=5 // pred_check_branch
        %359 = sbr.rel (%p357) target = $region24
      $region23: #{tpu_custom_call.1} parent=5 // pred_region
        // Predicated region
        $region25: #{tpu_custom_call.1} parent=23 // pred_check
          %p360 = pneg %p82
        $region26: #{tpu_custom_call.1} parent=23 // pred_check_branch
          %362 = sbr.rel (%p360) target = $region28
        $region27: #{tpu_custom_call.1} parent=23 // pred_region
          %s363 = sand.u32 %s20, 1
          %s364 = scalar_lea.sflag [#allocation4], %s363
          %s365 = sand.u32 %s72, 1
          %s366 = smul.addr %s365, 16
          %s367 = scalar_lea.vmem [#allocation8], %s366
          %s369 = ssub.s32 256, 256
          %370 = vsyncadd %s364, %s369
          %s371 = smul.addr %s20, 4
          %s372 = smul.addr %s371, 64
          %s373 = scalar_lea.hbm %s2, %s372
          %s374 = sshll.u32 %s367, 4
          %s375 = int_to_ptr.vmem [resolvable:$true] %s374
          %380 = dma.hbm_to_vmem [thread:$0]  %s373, 256, %s375, %s364, 64, 64, 4
        $region28: #{tpu_custom_call.1} parent=23 // pred_fallthru
          _
        // Predicated region
        $region29: #{tpu_custom_call.1} parent=23 // pred_check
          %p381 = pneg %p108
        $region30: #{tpu_custom_call.1} parent=23 // pred_check_branch
          %383 = sbr.rel (%p381) target = $region32
        $region31: #{tpu_custom_call.1} parent=23 // pred_region
          %s384 = sand.u32 %s20, 1
          %s385 = scalar_lea.sflag [#allocation4], %s384
          %s386 = sand.u32 %s98, 1
          %s387 = scalar_lea.vmem [#allocation9], %s386
          %s389 = ssub.s32 16, 16
          %390 = vsyncadd %s385, %s389
          %s391 = smul.addr %s20, 16
          %s392 = scalar_lea.hbm %s3, %s391
          %s394 = sshll.u32 %s387, 4
          %s395 = int_to_ptr.vmem [resolvable:$true] %s394
          %397 = dma.hbm_to_vmem [thread:$0]  %s392, 16, %s395, %s385
        $region32: #{tpu_custom_call.1} parent=23 // pred_fallthru
          _
        // Predicated region
        $region33: #{tpu_custom_call.1} parent=23 // pred_check
          %p398 = pneg %p134
        $region34: #{tpu_custom_call.1} parent=23 // pred_check_branch
          %400 = sbr.rel (%p398) target = $region36
        $region35: #{tpu_custom_call.1} parent=23 // pred_region
          %s401 = sand.u32 %s20, 1
          %s402 = scalar_lea.sflag [#allocation4], %s401
          %s403 = sand.u32 %s124, 1
          %s404 = smul.addr %s403, 16
          %s405 = scalar_lea.vmem [#allocation10], %s404
          %s407 = ssub.s32 256, 256
          %408 = vsyncadd %s402, %s407
          %s409 = smul.addr %s20, 4
          %s410 = smul.addr %s409, 64
          %s411 = scalar_lea.hbm %s4, %s410
          %s412 = sshll.u32 %s405, 4
          %s413 = int_to_ptr.vmem [resolvable:$true] %s412
          %418 = dma.hbm_to_vmem [thread:$0]  %s411, 256, %s413, %s402, 64, 64, 4
        $region36: #{tpu_custom_call.1} parent=23 // pred_fallthru
          _
        // Predicated region
        $region37: #{tpu_custom_call.1} parent=23 // pred_check
          %p419 = pneg %p160
        $region38: #{tpu_custom_call.1} parent=23 // pred_check_branch
          %421 = sbr.rel (%p419) target = $region40
        $region39: #{tpu_custom_call.1} parent=23 // pred_region
          %s422 = sand.u32 %s20, 1
          %s423 = scalar_lea.sflag [#allocation4], %s422
          %s424 = sand.u32 %s150, 1
          %s425 = scalar_lea.vmem [#allocation11], %s424
          %s427 = ssub.s32 16, 16
          %428 = vsyncadd %s423, %s427
          %s429 = smul.addr %s20, 16
          %s430 = scalar_lea.hbm %s5, %s429
          %s432 = sshll.u32 %s425, 4
          %s433 = int_to_ptr.vmem [resolvable:$true] %s432
          %435 = dma.hbm_to_vmem [thread:$0]  %s430, 16, %s433, %s423
        $region40: #{tpu_custom_call.1} parent=23 // pred_fallthru
          _
        // Predicated region
        $region41: #{tpu_custom_call.1} parent=23 // pred_check
          %p436 = pneg %p186
        $region42: #{tpu_custom_call.1} parent=23 // pred_check_branch
          %438 = sbr.rel (%p436) target = $region44
        $region43: #{tpu_custom_call.1} parent=23 // pred_region
          %s439 = sand.u32 %s20, 1
          %s440 = scalar_lea.sflag [#allocation4], %s439
          %s441 = sand.u32 %s176, 1
          %s442 = smul.addr %s441, 16
          %s443 = scalar_lea.vmem [#allocation12], %s442
          %s445 = ssub.s32 256, 256
          %446 = vsyncadd %s440, %s445
          %s447 = smul.addr %s20, 4
          %s448 = smul.addr %s447, 64
          %s449 = scalar_lea.hbm %s6, %s448
          %s450 = sshll.u32 %s443, 4
          %s451 = int_to_ptr.vmem [resolvable:$true] %s450
          %456 = dma.hbm_to_vmem [thread:$0]  %s449, 256, %s451, %s440, 64, 64, 4
        $region44: #{tpu_custom_call.1} parent=23 // pred_fallthru
          _
        // Predicated region
        $region45: #{tpu_custom_call.1} parent=23 // pred_check
          %p457 = pneg %p212
        $region46: #{tpu_custom_call.1} parent=23 // pred_check_branch
          %459 = sbr.rel (%p457) target = $region48
        $region47: #{tpu_custom_call.1} parent=23 // pred_region
          %s460 = sand.u32 %s20, 1
          %s461 = scalar_lea.sflag [#allocation4], %s460
          %s462 = sand.u32 %s202, 1
          %s463 = scalar_lea.vmem [#allocation13], %s462
          %s465 = ssub.s32 16, 16
          %466 = vsyncadd %s461, %s465
          %s467 = smul.addr %s20, 16
          %s468 = scalar_lea.hbm %s7, %s467
          %s470 = sshll.u32 %s463, 4
          %s471 = int_to_ptr.vmem [resolvable:$true] %s470
          %473 = dma.hbm_to_vmem [thread:$0]  %s468, 16, %s471, %s461
        $region48: #{tpu_custom_call.1} parent=23 // pred_fallthru
          _
        // Predicated region
        $region49: #{tpu_custom_call.1} parent=23 // pred_check
          %p474 = pneg %p238
        $region50: #{tpu_custom_call.1} parent=23 // pred_check_branch
          %476 = sbr.rel (%p474) target = $region52
        $region51: #{tpu_custom_call.1} parent=23 // pred_region
          %s477 = sand.u32 %s20, 1
          %s478 = scalar_lea.sflag [#allocation4], %s477
          %s479 = sand.u32 %s228, 1
          %s480 = smul.addr %s479, 32
          %s481 = scalar_lea.vmem [#allocation14], %s480
          %s483 = ssub.s32 512, 512
          %484 = vsyncadd %s478, %s483
          %s485 = smul.addr %s20, 8
          %s486 = smul.addr %s485, 64
          %s487 = scalar_lea.hbm %s8, %s486
          %s488 = sshll.u32 %s481, 4
          %s489 = int_to_ptr.vmem [resolvable:$true] %s488
          %494 = dma.hbm_to_vmem [thread:$0]  %s487, 512, %s489, %s478, 64, 64, 4
        $region52: #{tpu_custom_call.1} parent=23 // pred_fallthru
          _
        // Predicated region
        $region53: #{tpu_custom_call.1} parent=23 // pred_check
          %p495 = pneg %p264
        $region54: #{tpu_custom_call.1} parent=23 // pred_check_branch
          %497 = sbr.rel (%p495) target = $region56
        $region55: #{tpu_custom_call.1} parent=23 // pred_region
          %s498 = sand.u32 %s20, 1
          %s499 = scalar_lea.sflag [#allocation4], %s498
          %s500 = sand.u32 %s254, 1
          %s501 = scalar_lea.vmem [#allocation15], %s500
          %s503 = ssub.s32 16, 16
          %504 = vsyncadd %s499, %s503
          %s505 = smul.addr %s20, 16
          %s506 = scalar_lea.hbm %s9, %s505
          %s508 = sshll.u32 %s501, 4
          %s509 = int_to_ptr.vmem [resolvable:$true] %s508
          %511 = dma.hbm_to_vmem [thread:$0]  %s506, 16, %s509, %s499
        $region56: #{tpu_custom_call.1} parent=23 // pred_fallthru
          _
        // Predicated region
        $region57: #{tpu_custom_call.1} parent=23 // pred_check
          %p512 = pneg %p290
        $region58: #{tpu_custom_call.1} parent=23 // pred_check_branch
          %514 = sbr.rel (%p512) target = $region60
        $region59: #{tpu_custom_call.1} parent=23 // pred_region
          %s515 = sand.u32 %s20, 1
          %s516 = scalar_lea.sflag [#allocation4], %s515
          %s517 = sand.u32 %s280, 1
          %s518 = smul.addr %s517, 4
          %s519 = scalar_lea.vmem [#allocation16], %s518
          %s521 = ssub.s32 64, 64
          %522 = vsyncadd %s516, %s521
          %s523 = smul.addr %s20, 64
          %s524 = scalar_lea.hbm %s10, %s523
          %s526 = sshll.u32 %s519, 4
          %s527 = int_to_ptr.vmem [resolvable:$true] %s526
          %529 = dma.hbm_to_vmem [thread:$0]  %s524, 64, %s527, %s516
        $region60: #{tpu_custom_call.1} parent=23 // pred_fallthru
          _
      $region24: #{tpu_custom_call.1} parent=5 // pred_fallthru
        _
      %p530 = scmp.le.s32.totalorder 1, %s20
      %p531 = scmp.lt.s32.totalorder %s20, 3
      %p532 = pnand %p530, %p531
      %p533 = pneg %p532
      // Predicated region
      $region61: #{tpu_custom_call.1} parent=5 // pred_check
        _
      $region62: #{tpu_custom_call.1} parent=5 // pred_check_branch
        %535 = sbr.rel (%p532) target = $region64
      $region63: #{tpu_custom_call.1} parent=5 // pred_region
        %s536 = ssub.s32 %s20, 1
        // Predicated region
        $region65: #{tpu_custom_call.1} parent=63 // pred_check
          %p537 = pneg %p41
        $region66: #{tpu_custom_call.1} parent=63 // pred_check_branch
          %539 = sbr.rel (%p537) target = $region68
        $region67: #{tpu_custom_call.1} parent=63 // pred_region
          %540 = dma.done [#allocation4], 256
        $region68: #{tpu_custom_call.1} parent=63 // pred_fallthru
          _
        // Predicated region
        $region69: #{tpu_custom_call.1} parent=63 // pred_check
          %p541 = pneg %p62
        $region70: #{tpu_custom_call.1} parent=63 // pred_check_branch
          %543 = sbr.rel (%p541) target = $region72
        $region71: #{tpu_custom_call.1} parent=63 // pred_region
          %544 = dma.done [#allocation7], 32
        $region72: #{tpu_custom_call.1} parent=63 // pred_fallthru
          _
        %s545 = sand.u32 %s25, 1
        %s546 = scalar_lea.sflag [#allocation4], %s545
        %s547 = sand.u32 %s75, 1
        %s548 = smul.addr %s547, 16
        %s549 = scalar_lea.vmem [#allocation8], %s548
        // Predicated region
        $region73: #{tpu_custom_call.1} parent=63 // pred_check
          %p550 = pneg %p88
        $region74: #{tpu_custom_call.1} parent=63 // pred_check_branch
          %552 = sbr.rel (%p550) target = $region76
        $region75: #{tpu_custom_call.1} parent=63 // pred_region
          %553 = dma.done %s546, 256
        $region76: #{tpu_custom_call.1} parent=63 // pred_fallthru
          _
        %s554 = sand.u32 %s25, 1
        %s555 = scalar_lea.sflag [#allocation4], %s554
        %s556 = sand.u32 %s101, 1
        %s557 = scalar_lea.vmem [#allocation9], %s556
        // Predicated region
        $region77: #{tpu_custom_call.1} parent=63 // pred_check
          %p558 = pneg %p114
        $region78: #{tpu_custom_call.1} parent=63 // pred_check_branch
          %560 = sbr.rel (%p558) target = $region80
        $region79: #{tpu_custom_call.1} parent=63 // pred_region
          %561 = dma.done %s555, 16
        $region80: #{tpu_custom_call.1} parent=63 // pred_fallthru
          _
        %s562 = sand.u32 %s25, 1
        %s563 = scalar_lea.sflag [#allocation4], %s562
        %s564 = sand.u32 %s127, 1
        %s565 = smul.addr %s564, 16
        %s566 = scalar_lea.vmem [#allocation10], %s565
        // Predicated region
        $region81: #{tpu_custom_call.1} parent=63 // pred_check
          %p567 = pneg %p140
        $region82: #{tpu_custom_call.1} parent=63 // pred_check_branch
          %569 = sbr.rel (%p567) target = $region84
        $region83: #{tpu_custom_call.1} parent=63 // pred_region
          %570 = dma.done %s563, 256
        $region84: #{tpu_custom_call.1} parent=63 // pred_fallthru
          _
        %s571 = sand.u32 %s25, 1
        %s572 = scalar_lea.sflag [#allocation4], %s571
        %s573 = sand.u32 %s153, 1
        %s574 = scalar_lea.vmem [#allocation11], %s573
        // Predicated region
        $region85: #{tpu_custom_call.1} parent=63 // pred_check
          %p575 = pneg %p166
        $region86: #{tpu_custom_call.1} parent=63 // pred_check_branch
          %577 = sbr.rel (%p575) target = $region88
        $region87: #{tpu_custom_call.1} parent=63 // pred_region
          %578 = dma.done %s572, 16
        $region88: #{tpu_custom_call.1} parent=63 // pred_fallthru
          _
        %s579 = sand.u32 %s25, 1
        %s580 = scalar_lea.sflag [#allocation4], %s579
        %s581 = sand.u32 %s179, 1
        %s582 = smul.addr %s581, 16
        %s583 = scalar_lea.vmem [#allocation12], %s582
        // Predicated region
        $region89: #{tpu_custom_call.1} parent=63 // pred_check
          %p584 = pneg %p192
        $region90: #{tpu_custom_call.1} parent=63 // pred_check_branch
          %586 = sbr.rel (%p584) target = $region92
        $region91: #{tpu_custom_call.1} parent=63 // pred_region
          %587 = dma.done %s580, 256
        $region92: #{tpu_custom_call.1} parent=63 // pred_fallthru
          _
        %s588 = sand.u32 %s25, 1
        %s589 = scalar_lea.sflag [#allocation4], %s588
        %s590 = sand.u32 %s205, 1
        %s591 = scalar_lea.vmem [#allocation13], %s590
        // Predicated region
        $region93: #{tpu_custom_call.1} parent=63 // pred_check
          %p592 = pneg %p218
        $region94: #{tpu_custom_call.1} parent=63 // pred_check_branch
          %594 = sbr.rel (%p592) target = $region96
        $region95: #{tpu_custom_call.1} parent=63 // pred_region
          %595 = dma.done %s589, 16
        $region96: #{tpu_custom_call.1} parent=63 // pred_fallthru
          _
        %s596 = sand.u32 %s25, 1
        %s597 = scalar_lea.sflag [#allocation4], %s596
        %s598 = sand.u32 %s231, 1
        %s599 = smul.addr %s598, 32
        %s600 = scalar_lea.vmem [#allocation14], %s599
        // Predicated region
        $region97: #{tpu_custom_call.1} parent=63 // pred_check
          %p601 = pneg %p244
        $region98: #{tpu_custom_call.1} parent=63 // pred_check_branch
          %603 = sbr.rel (%p601) target = $region100
        $region99: #{tpu_custom_call.1} parent=63 // pred_region
          %604 = dma.done %s597, 512
        $region100: #{tpu_custom_call.1} parent=63 // pred_fallthru
          _
        %s605 = sand.u32 %s25, 1
        %s606 = scalar_lea.sflag [#allocation4], %s605
        %s607 = sand.u32 %s257, 1
        %s608 = scalar_lea.vmem [#allocation15], %s607
        // Predicated region
        $region101: #{tpu_custom_call.1} parent=63 // pred_check
          %p609 = pneg %p270
        $region102: #{tpu_custom_call.1} parent=63 // pred_check_branch
          %611 = sbr.rel (%p609) target = $region104
        $region103: #{tpu_custom_call.1} parent=63 // pred_region
          %612 = dma.done %s606, 16
        $region104: #{tpu_custom_call.1} parent=63 // pred_fallthru
          _
        %s613 = sand.u32 %s25, 1
        %s614 = scalar_lea.sflag [#allocation4], %s613
        %s615 = sand.u32 %s283, 1
        %s616 = smul.addr %s615, 4
        %s617 = scalar_lea.vmem [#allocation16], %s616
        // Predicated region
        $region105: #{tpu_custom_call.1} parent=63 // pred_check
          %p618 = pneg %p296
        $region106: #{tpu_custom_call.1} parent=63 // pred_check_branch
          %620 = sbr.rel (%p618) target = $region108
        $region107: #{tpu_custom_call.1} parent=63 // pred_region
          %621 = dma.done %s614, 64
        $region108: #{tpu_custom_call.1} parent=63 // pred_fallthru
          _
        %p622 = pneg %p41
        %p623 = pneg %p38
        %p624 = pneg %p62
        %p625 = pneg %p59
        %s626 = sand.u32 %s25, 1
        %s627 = scalar_lea.sflag [#allocation4], %s626
        %s628 = sand.u32 %s75, 1
        %s629 = smul.addr %s628, 16
        %s630 = scalar_lea.vmem [#allocation8], %s629
        %p631 = pneg %p88
        %p632 = pneg %p85
        %s633 = sand.u32 %s25, 1
        %s634 = scalar_lea.sflag [#allocation4], %s633
        %s635 = sand.u32 %s101, 1
        %s636 = scalar_lea.vmem [#allocation9], %s635
        %p637 = pneg %p114
        %p638 = pneg %p111
        %s639 = sand.u32 %s25, 1
        %s640 = scalar_lea.sflag [#allocation4], %s639
        %s641 = sand.u32 %s127, 1
        %s642 = smul.addr %s641, 16
        %s643 = scalar_lea.vmem [#allocation10], %s642
        %p644 = pneg %p140
        %p645 = pneg %p137
        %s646 = sand.u32 %s25, 1
        %s647 = scalar_lea.sflag [#allocation4], %s646
        %s648 = sand.u32 %s153, 1
        %s649 = scalar_lea.vmem [#allocation11], %s648
        %p650 = pneg %p166
        %p651 = pneg %p163
        %s652 = sand.u32 %s25, 1
        %s653 = scalar_lea.sflag [#allocation4], %s652
        %s654 = sand.u32 %s179, 1
        %s655 = smul.addr %s654, 16
        %s656 = scalar_lea.vmem [#allocation12], %s655
        %p657 = pneg %p192
        %p658 = pneg %p189
        %s659 = sand.u32 %s25, 1
        %s660 = scalar_lea.sflag [#allocation4], %s659
        %s661 = sand.u32 %s205, 1
        %s662 = scalar_lea.vmem [#allocation13], %s661
        %p663 = pneg %p218
        %p664 = pneg %p215
        %s665 = sand.u32 %s25, 1
        %s666 = scalar_lea.sflag [#allocation4], %s665
        %s667 = sand.u32 %s231, 1
        %s668 = smul.addr %s667, 32
        %s669 = scalar_lea.vmem [#allocation14], %s668
        %p670 = pneg %p244
        %p671 = pneg %p241
        %s672 = sand.u32 %s25, 1
        %s673 = scalar_lea.sflag [#allocation4], %s672
        %s674 = sand.u32 %s257, 1
        %s675 = scalar_lea.vmem [#allocation15], %s674
        %p676 = pneg %p270
        %p677 = pneg %p267
        %s678 = sand.u32 %s25, 1
        %s679 = scalar_lea.sflag [#allocation4], %s678
        %s680 = sand.u32 %s283, 1
        %s681 = smul.addr %s680, 4
        %s682 = scalar_lea.vmem [#allocation16], %s681
        %p683 = pneg %p296
        %p684 = pneg %p293
        %p685 = pneg %p317
        %p686 = pneg %p314
        %p688 = scmp.eq.s32.totalorder %s25, 0
        // Predicated region
        $region109: #{tpu_custom_call.1} parent=63 // pred_check
          %p689 = pneg %p688
        $region110: #{tpu_custom_call.1} parent=63 // pred_check_branch
          %691 = sbr.rel (%p689) target = $region112
        $region111: #{tpu_custom_call.1} parent=63 // pred_region
          %v692 = vld [vmem:[#allocation3] sm:$0xff]
          %v693 = vld [vmem:[#allocation3 + $0x8] sm:$0xff]
          %vm694 = vcmask 261120
          %695 = vst.msk [vmem:[#allocation2] sm:$0xff] %vm694, %v692
          %696 = vst.msk [vmem:[#allocation2 + $0x8] sm:$0xff] %vm694, %v693
        $region112: #{tpu_custom_call.1} parent=63 // pred_fallthru
          _
        %v697 = vld [vmem:[%s549] sm:$0xf]
        %v698 = vld [vmem:[%s549 + $0x4] sm:$0xf]
        %v699 = vld [vmem:[%s549 + $0x8] sm:$0xf]
        %v700 = vld [vmem:[%s549 + $0xc] sm:$0xf]
        %v701 = vld [vmem:[%s557] sm:$0x1]
        %v702 = vld [vmem:[%s566] sm:$0xf]
        %v703 = vld [vmem:[%s566 + $0x4] sm:$0xf]
        %v704 = vld [vmem:[%s566 + $0x8] sm:$0xf]
        %v705 = vld [vmem:[%s566 + $0xc] sm:$0xf]
        %v706 = vld [vmem:[%s574] sm:$0x1]
        %v707 = vld [vmem:[%s583] sm:$0xf]
        %v708 = vld [vmem:[%s583 + $0x4] sm:$0xf]
        %v709 = vld [vmem:[%s583 + $0x8] sm:$0xf]
        %v710 = vld [vmem:[%s583 + $0xc] sm:$0xf]
        %v711 = vld [vmem:[%s591] sm:$0x1]
        %v712 = vld [vmem:[%s600] sm:$0xf]
        %v713 = vld [vmem:[%s600 + $0x4] sm:$0xf]
        %v714 = vld [vmem:[%s600 + $0x8] sm:$0xf]
        %v715 = vld [vmem:[%s600 + $0xc] sm:$0xf]
        %v716 = vld [vmem:[%s600 + $0x10] sm:$0xf]
        %v717 = vld [vmem:[%s600 + $0x14] sm:$0xf]
        %v718 = vld [vmem:[%s600 + $0x18] sm:$0xf]
        %v719 = vld [vmem:[%s600 + $0x1c] sm:$0xf]
        %v720 = vld [vmem:[%s608] sm:$0x1]
        %v721 = vld [vmem:[%s617] sm:$0xf]
        %v722 = vld [vmem:[#allocation2] sm:$0xff]
        %v723 = vld [vmem:[#allocation2 + $0x8] sm:$0xff]
        %v724 = vld [vmem:[#allocation6] sm:$0x3]
        %v727 = vunpack.c.l.s4 1966171168
        %v728 = vunpack.c.0.s8 %v727
        %v729 = vlaneseq
        %v730 = vshrl.u32 %v729, 7
        %v731 = vsub.s32 %v728, %v730
        %v732 = vrot.slane %v724, %v731
        %v733 = vcombine.high %v732, %v732
        %v735 = vunpack.c.l.s4 1966171168
        %v736 = vunpack.c.0.s8 %v735
        %v737 = vlaneseq
        %v738 = vshrl.u32 %v737, 7
        %v739 = vsub.s32 %v736, %v738
        %v740 = vrot.slane %v732, %v739
        %v742 = vunpack.c.l.s4 1966171168
        %v743 = vunpack.c.0.s8 %v742
        %v744 = vlaneseq
        %v745 = vshrl.u32 %v744, 7
        %v746 = vsub.s32 %v743, %v745
        %v747 = vrot.slane %v733, %v746
        %v748 = vpack.c.bf16 %v723, %v722
        %v750 = vlaneseq
        %v751 = vshrl.u32 %v750, 7
        %v752 = vsub.s32 0, %v751
        %v753 = vrot.slane %v701, %v752
        %v759 = vunpack.c.l.b16 %v697
        %v760 = vunpack.c.l.b16 %v698
        %v761 = vunpack.c.l.b16 %v699
        %v762 = vunpack.c.l.b16 %v700
        %v763 = vpack.c.b16 %v760, %v759
        %v764 = vpack.c.b16 %v762, %v761
        %vm767 = vcmask 261120
        %v769 = vsel %vm767, %v748, 0
        %771 = vmatprep.subr.bf16.mxu0 0
        %772 = vmatpush1.bf16.msra.mxu0 %v763
        %773 = vmatprep.subr.bf16.mxu0 0
        %774 = vmatpush1.bf16.msra.mxu0 %v764
        %775 = vmatprep.subr.bf16.mxu0 0
        %776 = vmatpush1.bf16.msra.mxu0 0
        %777 = vmatprep.subr.bf16.mxu0 0
        %778 = vmatpush1.bf16.msra.mxu0 0
        %779 = vmatprep.subr.bf16.mxu0 0
        %780 = vmatpush1.bf16.msra.mxu0 0
        %781 = vmatprep.subr.bf16.mxu0 0
        %782 = vmatpush1.bf16.msra.mxu0 0
        %783 = vmatprep.subr.bf16.mxu0 0
        %784 = vmatpush1.bf16.msra.mxu0 0
        %785 = vmatprep.subr.bf16.mxu0 0
        %786 = vmatpush1.bf16.msra.mxu0 0
        %787 = vmatprep.subr.bf16.mxu0 0
        %788 = vmatpush1.bf16.msra.mxu0 0
        %789 = vmatprep.subr.bf16.mxu0 0
        %790 = vmatpush1.bf16.msra.mxu0 0
        %791 = vmatprep.subr.bf16.mxu0 0
        %792 = vmatpush1.bf16.msra.mxu0 0
        %793 = vmatprep.subr.bf16.mxu0 0
        %794 = vmatpush1.bf16.msra.mxu0 0
        %795 = vmatprep.subr.bf16.mxu0 0
        %796 = vmatpush1.bf16.msra.mxu0 0
        %797 = vmatprep.subr.bf16.mxu0 0
        %798 = vmatpush1.bf16.msra.mxu0 0
        %799 = vmatprep.subr.bf16.mxu0 0
        %800 = vmatpush1.bf16.msra.mxu0 0
        %801 = vmatprep.subr.bf16.mxu0 0
        %802 = vmatpush1.bf16.msra.mxu0 0
        %803 = vmatprep.mubr.bf16.mxu0 0
        %804 = vmatmul.mubr.bf16.gmra.mrb[0].mxu0 %v769
        %v805 = vpop.f32.mrb[0].mxu0
        %v806 = vadd.f32 %v753, %v805
        %v807 = vpop.f32.mrb[0].mxu0
        %v808 = vpop.f32.mrb[0].mxu0
        %v809 = vadd.f32 %v753, %v808
        %v810 = vpop.f32.mrb[0].mxu0
        %811 = vdwg.mxu0
        %v812 = vmul.f32 %v806, 0.35355338
        %v813 = vmul.f32 %v809, 0.35355338
        %v814 = vpack.c.bf16 %v813, %v812
        %v816 = vunpack.c.l.b16 %v814
        %v817 = vunpack.c.h.b16 %v814
        %v818 = vpack.c.b16 %v816, %v816
        %v819 = vpack.c.b16 %v817, %v817
        %v820 = vpack.c.bf16 %v809, %v806
        %v822 = vunpack.c.l.b16 %v820
        %v823 = vunpack.c.h.b16 %v820
        %v824 = vlaneseq
        %v825 = vshrl.u32 %v824, 7
        %v826 = vsub.s32 0, %v825
        %v827 = vrot.slane %v740, %v826
        %v828 = vlaneseq
        %v829 = vshrl.u32 %v828, 7
        %v830 = vsub.s32 0, %v829
        %v831 = vrot.slane %v747, %v830
        %v834 = vpack.c.b16 %v822, %v822
        %835 = vrot.lane.b32.xlu0 %v834, 96
        %v836 = vpop.permute.xlu0 %835
        %vm837 = vcmask 64512
        %v839 = vsel %vm837, %v818, 0
        %v842 = vsel %vm837, %v836, 0
        %844 = vmatprep.subr.bf16.mxu0 0
        %845 = vmatpush1.bf16.xpose.msra.mxu0 %v842
        %846 = vmatprep.subr.bf16.mxu0 0
        %847 = vmatpush1.bf16.xpose.msra.mxu0 0
        %848 = vmatprep.subr.bf16.mxu0 0
        %849 = vmatpush1.bf16.xpose.msra.mxu0 0
        %850 = vmatprep.subr.bf16.mxu0 0
        %851 = vmatpush1.bf16.xpose.msra.mxu0 0
        %852 = vmatprep.subr.bf16.mxu0 0
        %853 = vmatpush1.bf16.xpose.msra.mxu0 0
        %854 = vmatprep.subr.bf16.mxu0 0
        %855 = vmatpush1.bf16.xpose.msra.mxu0 0
        %856 = vmatprep.subr.bf16.mxu0 0
        %857 = vmatpush1.bf16.xpose.msra.mxu0 0
        %858 = vmatprep.subr.bf16.mxu0 0
        %859 = vmatpush1.bf16.xpose.msra.mxu0 0
        %860 = vmatprep.subr.bf16.mxu0 0
        %861 = vmatpush1.bf16.xpose.msra.mxu0 0
        %862 = vmatprep.subr.bf16.mxu0 0
        %863 = vmatpush1.bf16.xpose.msra.mxu0 0
        %864 = vmatprep.subr.bf16.mxu0 0
        %865 = vmatpush1.bf16.xpose.msra.mxu0 0
        %866 = vmatprep.subr.bf16.mxu0 0
        %867 = vmatpush1.bf16.xpose.msra.mxu0 0
        %868 = vmatprep.subr.bf16.mxu0 0
        %869 = vmatpush1.bf16.xpose.msra.mxu0 0
        %870 = vmatprep.subr.bf16.mxu0 0
        %871 = vmatpush1.bf16.xpose.msra.mxu0 0
        %872 = vmatprep.subr.bf16.mxu0 0
        %873 = vmatpush1.bf16.xpose.msra.mxu0 0
        %874 = vmatprep.subr.bf16.mxu0 0
        %875 = vmatpush1.bf16.xpose.msra.mxu0 0
        %876 = vmatprep.mubr.bf16.mxu0 0
        %877 = vmatmul.mubr.bf16.gmra.mrb[0].mxu0 %v839
        %v878 = vpop.f32.mrb[0].mxu0
        %v879 = vadd.f32 %v827, %v878
        %v880 = vpop.f32.mrb[0].mxu0
        %v881 = vpop.f32.mrb[0].mxu0
        %v882 = vpop.f32.mrb[0].mxu0
        %883 = vdwg.mxu0
        %v884 = vpack.c.b16 %v823, %v823
        %885 = vrot.lane.b32.xlu0 %v884, 96
        %v886 = vpop.permute.xlu0 %885
        %v888 = vsel %vm837, %v819, 0
        %v891 = vsel %vm837, %v886, 0
        %893 = vmatprep.subr.bf16.mxu0 0
        %894 = vmatpush1.bf16.xpose.msra.mxu0 %v891
        %895 = vmatprep.subr.bf16.mxu0 0
        %896 = vmatpush1.bf16.xpose.msra.mxu0 0
        %897 = vmatprep.subr.bf16.mxu0 0
        %898 = vmatpush1.bf16.xpose.msra.mxu0 0
        %899 = vmatprep.subr.bf16.mxu0 0
        %900 = vmatpush1.bf16.xpose.msra.mxu0 0
        %901 = vmatprep.subr.bf16.mxu0 0
        %902 = vmatpush1.bf16.xpose.msra.mxu0 0
        %903 = vmatprep.subr.bf16.mxu0 0
        %904 = vmatpush1.bf16.xpose.msra.mxu0 0
        %905 = vmatprep.subr.bf16.mxu0 0
        %906 = vmatpush1.bf16.xpose.msra.mxu0 0
        %907 = vmatprep.subr.bf16.mxu0 0
        %908 = vmatpush1.bf16.xpose.msra.mxu0 0
        %909 = vmatprep.subr.bf16.mxu0 0
        %910 = vmatpush1.bf16.xpose.msra.mxu0 0
        %911 = vmatprep.subr.bf16.mxu0 0
        %912 = vmatpush1.bf16.xpose.msra.mxu0 0
        %913 = vmatprep.subr.bf16.mxu0 0
        %914 = vmatpush1.bf16.xpose.msra.mxu0 0
        %915 = vmatprep.subr.bf16.mxu0 0
        %916 = vmatpush1.bf16.xpose.msra.mxu0 0
        %917 = vmatprep.subr.bf16.mxu0 0
        %918 = vmatpush1.bf16.xpose.msra.mxu0 0
        %919 = vmatprep.subr.bf16.mxu0 0
        %920 = vmatpush1.bf16.xpose.msra.mxu0 0
        %921 = vmatprep.subr.bf16.mxu0 0
        %922 = vmatpush1.bf16.xpose.msra.mxu0 0
        %923 = vmatprep.subr.bf16.mxu0 0
        %924 = vmatpush1.bf16.xpose.msra.mxu0 0
        %925 = vmatprep.mubr.bf16.mxu0 0
        %926 = vmatmul.mubr.bf16.gmra.mrb[0].mxu0 %v888
        %v927 = vpop.f32.mrb[0].mxu0
        %v928 = vadd.f32 %v831, %v927
        %v929 = vpop.f32.mrb[0].mxu0
        %v930 = vpop.f32.mrb[0].mxu0
        %v931 = vpop.f32.mrb[0].mxu0
        %932 = vdwg.mxu0
        %v933 = vsel %vm837, %v879, -inf
        %934 = vmax.xlane.f32.xlu0 %v933
        %v935 = vpop.xlane.xlu0 %934
        %v936 = vsel %vm837, %v928, -inf
        %937 = vmax.xlane.f32.xlu0 %v936
        %v938 = vpop.xlane.xlu0 %937
        %v939 = vsub.f32 %v879, %v935
        %v940 = vsub.f32 %v928, %v938
        %v941 = vmul.f32 %v939, 1.442695
        %v942 = vpow.pop %v941
        %v943 = vmul.f32 %v940, 1.442695
        %v944 = vpow.pop %v943
        %v945 = vsel %vm837, %v942, 0.0
        %946 = vadd.xlane.f32.xlu0 %v945
        %v947 = vpop.xlane.xlu0 %946
        %v948 = vsel %vm837, %v944, 0.0
        %949 = vadd.xlane.f32.xlu0 %v948
        %v950 = vpop.xlane.xlu0 %949
        %v951 = vrcp.pop %v947
        %v952 = vrcp.pop %v950
        %v953 = vmul.f32 %v942, %v951
        %v954 = vmul.f32 %v944, %v952
        %v955 = vpack.c.bf16 %v953, %v953
        %v956 = vpack.c.bf16 %v954, %v954
        %957 = vrot.lane.b32.xlu0 %v834, 64
        %v958 = vpop.permute.xlu0 %957
        %v960 = vsel %vm837, %v955, 0
        %vm962 = vcmask 1043456
        %v964 = vsel %vm962, %v958, 0
        %966 = vmatprep.subr.bf16.mxu0 0
        %967 = vmatpush1.bf16.msra.mxu0 %v964
        %968 = vmatprep.subr.bf16.mxu0 0
        %969 = vmatpush1.bf16.msra.mxu0 0
        %970 = vmatprep.subr.bf16.mxu0 0
        %971 = vmatpush1.bf16.msra.mxu0 0
        %972 = vmatprep.subr.bf16.mxu0 0
        %973 = vmatpush1.bf16.msra.mxu0 0
        %974 = vmatprep.subr.bf16.mxu0 0
        %975 = vmatpush1.bf16.msra.mxu0 0
        %976 = vmatprep.subr.bf16.mxu0 0
        %977 = vmatpush1.bf16.msra.mxu0 0
        %978 = vmatprep.subr.bf16.mxu0 0
        %979 = vmatpush1.bf16.msra.mxu0 0
        %980 = vmatprep.subr.bf16.mxu0 0
        %981 = vmatpush1.bf16.msra.mxu0 0
        %982 = vmatprep.subr.bf16.mxu0 0
        %983 = vmatpush1.bf16.msra.mxu0 0
        %984 = vmatprep.subr.bf16.mxu0 0
        %985 = vmatpush1.bf16.msra.mxu0 0
        %986 = vmatprep.subr.bf16.mxu0 0
        %987 = vmatpush1.bf16.msra.mxu0 0
        %988 = vmatprep.subr.bf16.mxu0 0
        %989 = vmatpush1.bf16.msra.mxu0 0
        %990 = vmatprep.subr.bf16.mxu0 0
        %991 = vmatpush1.bf16.msra.mxu0 0
        %992 = vmatprep.subr.bf16.mxu0 0
        %993 = vmatpush1.bf16.msra.mxu0 0
        %994 = vmatprep.subr.bf16.mxu0 0
        %995 = vmatpush1.bf16.msra.mxu0 0
        %996 = vmatprep.subr.bf16.mxu0 0
        %997 = vmatpush1.bf16.msra.mxu0 0
        %998 = vmatprep.mubr.bf16.mxu0 0
        %999 = vmatmul.mubr.bf16.gmra.mrb[0].mxu0 %v960
        %v1000 = vpop.f32.mrb[0].mxu0
        %v1001 = vadd.f32 0.0, %v1000
        %v1002 = vpop.f32.mrb[0].mxu0
        %v1003 = vpop.f32.mrb[0].mxu0
        %v1004 = vpop.f32.mrb[0].mxu0
        %1005 = vdwg.mxu0
        %1006 = vrot.lane.b32.xlu0 %v884, 64
        %v1007 = vpop.permute.xlu0 %1006
        %v1009 = vsel %vm837, %v956, 0
        %v1012 = vsel %vm962, %v1007, 0
        %1014 = vmatprep.subr.bf16.mxu0 0
        %1015 = vmatpush1.bf16.msra.mxu0 %v1012
        %1016 = vmatprep.subr.bf16.mxu0 0
        %1017 = vmatpush1.bf16.msra.mxu0 0
        %1018 = vmatprep.subr.bf16.mxu0 0
        %1019 = vmatpush1.bf16.msra.mxu0 0
        %1020 = vmatprep.subr.bf16.mxu0 0
        %1021 = vmatpush1.bf16.msra.mxu0 0
        %1022 = vmatprep.subr.bf16.mxu0 0
        %1023 = vmatpush1.bf16.msra.mxu0 0
        %1024 = vmatprep.subr.bf16.mxu0 0
        %1025 = vmatpush1.bf16.msra.mxu0 0
        %1026 = vmatprep.subr.bf16.mxu0 0
        %1027 = vmatpush1.bf16.msra.mxu0 0
        %1028 = vmatprep.subr.bf16.mxu0 0
        %1029 = vmatpush1.bf16.msra.mxu0 0
        %1030 = vmatprep.subr.bf16.mxu0 0
        %1031 = vmatpush1.bf16.msra.mxu0 0
        %1032 = vmatprep.subr.bf16.mxu0 0
        %1033 = vmatpush1.bf16.msra.mxu0 0
        %1034 = vmatprep.subr.bf16.mxu0 0
        %1035 = vmatpush1.bf16.msra.mxu0 0
        %1036 = vmatprep.subr.bf16.mxu0 0
        %1037 = vmatpush1.bf16.msra.mxu0 0
        %1038 = vmatprep.subr.bf16.mxu0 0
        %1039 = vmatpush1.bf16.msra.mxu0 0
        %1040 = vmatprep.subr.bf16.mxu0 0
        %1041 = vmatpush1.bf16.msra.mxu0 0
        %1042 = vmatprep.subr.bf16.mxu0 0
        %1043 = vmatpush1.bf16.msra.mxu0 0
        %1044 = vmatprep.subr.bf16.mxu0 0
        %1045 = vmatpush1.bf16.msra.mxu0 0
        %1046 = vmatprep.mubr.bf16.mxu0 0
        %1047 = vmatmul.mubr.bf16.gmra.mrb[0].mxu0 %v1009
        %v1048 = vpop.f32.mrb[0].mxu0
        %v1049 = vadd.f32 0.0, %v1048
        %v1050 = vpop.f32.mrb[0].mxu0
        %v1051 = vpop.f32.mrb[0].mxu0
        %v1052 = vpop.f32.mrb[0].mxu0
        %1053 = vdwg.mxu0
        %v1054 = vpack.c.bf16 %v1049, %v1001
        %1055 = vrot.lane.b32.xlu0 %v818, 120
        %v1056 = vpop.permute.xlu0 %1055
        %1057 = vrot.lane.b32.xlu0 %v834, 88
        %v1058 = vpop.permute.xlu0 %1057
        %v1060 = vsel %vm837, %v1056, 0
        %v1063 = vsel %vm837, %v1058, 0
        %1065 = vmatprep.subr.bf16.mxu0 0
        %1066 = vmatpush1.bf16.xpose.msra.mxu0 %v1063
        %1067 = vmatprep.subr.bf16.mxu0 0
        %1068 = vmatpush1.bf16.xpose.msra.mxu0 0
        %1069 = vmatprep.subr.bf16.mxu0 0
        %1070 = vmatpush1.bf16.xpose.msra.mxu0 0
        %1071 = vmatprep.subr.bf16.mxu0 0
        %1072 = vmatpush1.bf16.xpose.msra.mxu0 0
        %1073 = vmatprep.subr.bf16.mxu0 0
        %1074 = vmatpush1.bf16.xpose.msra.mxu0 0
        %1075 = vmatprep.subr.bf16.mxu0 0
        %1076 = vmatpush1.bf16.xpose.msra.mxu0 0
        %1077 = vmatprep.subr.bf16.mxu0 0
        %1078 = vmatpush1.bf16.xpose.msra.mxu0 0
        %1079 = vmatprep.subr.bf16.mxu0 0
        %1080 = vmatpush1.bf16.xpose.msra.mxu0 0
        %1081 = vmatprep.subr.bf16.mxu0 0
        %1082 = vmatpush1.bf16.xpose.msra.mxu0 0
        %1083 = vmatprep.subr.bf16.mxu0 0
        %1084 = vmatpush1.bf16.xpose.msra.mxu0 0
        %1085 = vmatprep.subr.bf16.mxu0 0
        %1086 = vmatpush1.bf16.xpose.msra.mxu0 0
        %1087 = vmatprep.subr.bf16.mxu0 0
        %1088 = vmatpush1.bf16.xpose.msra.mxu0 0
        %1089 = vmatprep.subr.bf16.mxu0 0
        %1090 = vmatpush1.bf16.xpose.msra.mxu0 0
        %1091 = vmatprep.subr.bf16.mxu0 0
        %1092 = vmatpush1.bf16.xpose.msra.mxu0 0
        %1093 = vmatprep.subr.bf16.mxu0 0
        %1094 = vmatpush1.bf16.xpose.msra.mxu0 0
        %1095 = vmatprep.subr.bf16.mxu0 0
        %1096 = vmatpush1.bf16.xpose.msra.mxu0 0
        %1097 = vmatprep.mubr.bf16.mxu0 0
        %1098 = vmatmul.mubr.bf16.gmra.mrb[0].mxu0 %v1060
        %v1099 = vpop.f32.mrb[0].mxu0
        %v1100 = vadd.f32 %v827, %v1099
        %v1101 = vpop.f32.mrb[0].mxu0
        %v1102 = vpop.f32.mrb[0].mxu0
        %v1103 = vpop.f32.mrb[0].mxu0
        %1104 = vdwg.mxu0
        %1105 = vrot.lane.b32.xlu0 %v819, 120
        %v1106 = vpop.permute.xlu0 %1105
        %1107 = vrot.lane.b32.xlu0 %v884, 88
        %v1108 = vpop.permute.xlu0 %1107
        %v1110 = vsel %vm837, %v1106, 0
        %v1113 = vsel %vm837, %v1108, 0
        %1115 = vmatprep.subr.bf16.mxu0 0
        %1116 = vmatpush1.bf16.xpose.msra.mxu0 %v1113
        %1117 = vmatprep.subr.bf16.mxu0 0
        %1118 = vmatpush1.bf16.xpose.msra.mxu0 0
        %1119 = vmatprep.subr.bf16.mxu0 0
        %1120 = vmatpush1.bf16.xpose.msra.mxu0 0
        %1121 = vmatprep.subr.bf16.mxu0 0
        %1122 = vmatpush1.bf16.xpose.msra.mxu0 0
        %1123 = vmatprep.subr.bf16.mxu0 0
        %1124 = vmatpush1.bf16.xpose.msra.mxu0 0
        %1125 = vmatprep.subr.bf16.mxu0 0
        %1126 = vmatpush1.bf16.xpose.msra.mxu0 0
        %1127 = vmatprep.subr.bf16.mxu0 0
        %1128 = vmatpush1.bf16.xpose.msra.mxu0 0
        %1129 = vmatprep.subr.bf16.mxu0 0
        %1130 = vmatpush1.bf16.xpose.msra.mxu0 0
        %1131 = vmatprep.subr.bf16.mxu0 0
        %1132 = vmatpush1.bf16.xpose.msra.mxu0 0
        %1133 = vmatprep.subr.bf16.mxu0 0
        %1134 = vmatpush1.bf16.xpose.msra.mxu0 0
        %1135 = vmatprep.subr.bf16.mxu0 0
        %1136 = vmatpush1.bf16.xpose.msra.mxu0 0
        %1137 = vmatprep.subr.bf16.mxu0 0
        %1138 = vmatpush1.bf16.xpose.msra.mxu0 0
        %1139 = vmatprep.subr.bf16.mxu0 0
        %1140 = vmatpush1.bf16.xpose.msra.mxu0 0
        %1141 = vmatprep.subr.bf16.mxu0 0
        %1142 = vmatpush1.bf16.xpose.msra.mxu0 0
        %1143 = vmatprep.subr.bf16.mxu0 0
        %1144 = vmatpush1.bf16.xpose.msra.mxu0 0
        %1145 = vmatprep.subr.bf16.mxu0 0
        %1146 = vmatpush1.bf16.xpose.msra.mxu0 0
        %1147 = vmatprep.mubr.bf16.mxu0 0
        %1148 = vmatmul.mubr.bf16.gmra.mrb[0].mxu0 %v1110
        %v1149 = vpop.f32.mrb[0].mxu0
        %v1150 = vadd.f32 %v831, %v1149
        %v1151 = vpop.f32.mrb[0].mxu0
        %v1152 = vpop.f32.mrb[0].mxu0
        %v1153 = vpop.f32.mrb[0].mxu0
        %1154 = vdwg.mxu0
        %v1155 = vsel %vm837, %v1100, -inf
        %1156 = vmax.xlane.f32.xlu0 %v1155
        %v1157 = vpop.xlane.xlu0 %1156
        %v1158 = vsel %vm837, %v1150, -inf
        %1159 = vmax.xlane.f32.xlu0 %v1158
        %v1160 = vpop.xlane.xlu0 %1159
        %v1161 = vsub.f32 %v1100, %v1157
        %v1162 = vsub.f32 %v1150, %v1160
        %v1163 = vmul.f32 %v1161, 1.442695
        %v1164 = vpow.pop %v1163
        %v1165 = vmul.f32 %v1162, 1.442695
        %v1166 = vpow.pop %v1165
        %v1167 = vsel %vm837, %v1164, 0.0
        %1168 = vadd.xlane.f32.xlu0 %v1167
        %v1169 = vpop.xlane.xlu0 %1168
        %v1170 = vsel %vm837, %v1166, 0.0
        %1171 = vadd.xlane.f32.xlu0 %v1170
        %v1172 = vpop.xlane.xlu0 %1171
        %v1173 = vrcp.pop %v1169
        %v1174 = vrcp.pop %v1172
        %v1175 = vmul.f32 %v1164, %v1173
        %v1176 = vmul.f32 %v1166, %v1174
        %v1177 = vpack.c.bf16 %v1175, %v1175
        %v1178 = vpack.c.bf16 %v1176, %v1176
        %1179 = vrot.lane.b32.xlu0 %v834, 56
        %v1180 = vpop.permute.xlu0 %1179
        %v1182 = vsel %vm837, %v1177, 0
        %v1185 = vsel %vm962, %v1180, 0
        %1187 = vmatprep.subr.bf16.mxu0 0
        %1188 = vmatpush1.bf16.msra.mxu0 %v1185
        %1189 = vmatprep.subr.bf16.mxu0 0
        %1190 = vmatpush1.bf16.msra.mxu0 0
        %1191 = vmatprep.subr.bf16.mxu0 0
        %1192 = vmatpush1.bf16.msra.mxu0 0
        %1193 = vmatprep.subr.bf16.mxu0 0
        %1194 = vmatpush1.bf16.msra.mxu0 0
        %1195 = vmatprep.subr.bf16.mxu0 0
        %1196 = vmatpush1.bf16.msra.mxu0 0
        %1197 = vmatprep.subr.bf16.mxu0 0
        %1198 = vmatpush1.bf16.msra.mxu0 0
        %1199 = vmatprep.subr.bf16.mxu0 0
        %1200 = vmatpush1.bf16.msra.mxu0 0
        %1201 = vmatprep.subr.bf16.mxu0 0
        %1202 = vmatpush1.bf16.msra.mxu0 0
        %1203 = vmatprep.subr.bf16.mxu0 0
        %1204 = vmatpush1.bf16.msra.mxu0 0
        %1205 = vmatprep.subr.bf16.mxu0 0
        %1206 = vmatpush1.bf16.msra.mxu0 0
        %1207 = vmatprep.subr.bf16.mxu0 0
        %1208 = vmatpush1.bf16.msra.mxu0 0
        %1209 = vmatprep.subr.bf16.mxu0 0
        %1210 = vmatpush1.bf16.msra.mxu0 0
        %1211 = vmatprep.subr.bf16.mxu0 0
        %1212 = vmatpush1.bf16.msra.mxu0 0
        %1213 = vmatprep.subr.bf16.mxu0 0
        %1214 = vmatpush1.bf16.msra.mxu0 0
        %1215 = vmatprep.subr.bf16.mxu0 0
        %1216 = vmatpush1.bf16.msra.mxu0 0
        %1217 = vmatprep.subr.bf16.mxu0 0
        %1218 = vmatpush1.bf16.msra.mxu0 0
        %1219 = vmatprep.mubr.bf16.mxu0 0
        %1220 = vmatmul.mubr.bf16.gmra.mrb[0].mxu0 %v1182
        %v1221 = vpop.f32.mrb[0].mxu0
        %v1222 = vadd.f32 0.0, %v1221
        %v1223 = vpop.f32.mrb[0].mxu0
        %v1224 = vpop.f32.mrb[0].mxu0
        %v1225 = vpop.f32.mrb[0].mxu0
        %1226 = vdwg.mxu0
        %1227 = vrot.lane.b32.xlu0 %v884, 56
        %v1228 = vpop.permute.xlu0 %1227
        %v1230 = vsel %vm837, %v1178, 0
        %v1233 = vsel %vm962, %v1228, 0
        %1235 = vmatprep.subr.bf16.mxu0 0
        %1236 = vmatpush1.bf16.msra.mxu0 %v1233
        %1237 = vmatprep.subr.bf16.mxu0 0
        %1238 = vmatpush1.bf16.msra.mxu0 0
        %1239 = vmatprep.subr.bf16.mxu0 0
        %1240 = vmatpush1.bf16.msra.mxu0 0
        %1241 = vmatprep.subr.bf16.mxu0 0
        %1242 = vmatpush1.bf16.msra.mxu0 0
        %1243 = vmatprep.subr.bf16.mxu0 0
        %1244 = vmatpush1.bf16.msra.mxu0 0
        %1245 = vmatprep.subr.bf16.mxu0 0
        %1246 = vmatpush1.bf16.msra.mxu0 0
        %1247 = vmatprep.subr.bf16.mxu0 0
        %1248 = vmatpush1.bf16.msra.mxu0 0
        %1249 = vmatprep.subr.bf16.mxu0 0
        %1250 = vmatpush1.bf16.msra.mxu0 0
        %1251 = vmatprep.subr.bf16.mxu0 0
        %1252 = vmatpush1.bf16.msra.mxu0 0
        %1253 = vmatprep.subr.bf16.mxu0 0
        %1254 = vmatpush1.bf16.msra.mxu0 0
        %1255 = vmatprep.subr.bf16.mxu0 0
        %1256 = vmatpush1.bf16.msra.mxu0 0
        %1257 = vmatprep.subr.bf16.mxu0 0
        %1258 = vmatpush1.bf16.msra.mxu0 0
        %1259 = vmatprep.subr.bf16.mxu0 0
        %1260 = vmatpush1.bf16.msra.mxu0 0
        %1261 = vmatprep.subr.bf16.mxu0 0
        %1262 = vmatpush1.bf16.msra.mxu0 0
        %1263 = vmatprep.subr.bf16.mxu0 0
        %1264 = vmatpush1.bf16.msra.mxu0 0
        %1265 = vmatprep.subr.bf16.mxu0 0
        %1266 = vmatpush1.bf16.msra.mxu0 0
        %1267 = vmatprep.mubr.bf16.mxu0 0
        %1268 = vmatmul.mubr.bf16.gmra.mrb[0].mxu0 %v1230
        %v1269 = vpop.f32.mrb[0].mxu0
        %v1270 = vadd.f32 0.0, %v1269
        %v1271 = vpop.f32.mrb[0].mxu0
        %v1272 = vpop.f32.mrb[0].mxu0
        %v1273 = vpop.f32.mrb[0].mxu0
        %1274 = vdwg.mxu0
        %v1275 = vpack.c.bf16 %v1270, %v1222
        %v1277 = vsel %vm837, %v1275, 0
        %v1280 = vsel %vm962, %v703, 0
        %1282 = vmatprep.subr.bf16.mxu0 0
        %1283 = vmatpush1.bf16.msra.mxu0 %v1280
        %1284 = vmatprep.subr.bf16.mxu0 0
        %1285 = vmatpush1.bf16.msra.mxu0 0
        %1286 = vmatprep.subr.bf16.mxu0 0
        %1287 = vmatpush1.bf16.msra.mxu0 0
        %1288 = vmatprep.subr.bf16.mxu0 0
        %1289 = vmatpush1.bf16.msra.mxu0 0
        %1290 = vmatprep.subr.bf16.mxu0 0
        %1291 = vmatpush1.bf16.msra.mxu0 0
        %1292 = vmatprep.subr.bf16.mxu0 0
        %1293 = vmatpush1.bf16.msra.mxu0 0
        %1294 = vmatprep.subr.bf16.mxu0 0
        %1295 = vmatpush1.bf16.msra.mxu0 0
        %1296 = vmatprep.subr.bf16.mxu0 0
        %1297 = vmatpush1.bf16.msra.mxu0 0
        %1298 = vmatprep.subr.bf16.mxu0 0
        %1299 = vmatpush1.bf16.msra.mxu0 0
        %1300 = vmatprep.subr.bf16.mxu0 0
        %1301 = vmatpush1.bf16.msra.mxu0 0
        %1302 = vmatprep.subr.bf16.mxu0 0
        %1303 = vmatpush1.bf16.msra.mxu0 0
        %1304 = vmatprep.subr.bf16.mxu0 0
        %1305 = vmatpush1.bf16.msra.mxu0 0
        %1306 = vmatprep.subr.bf16.mxu0 0
        %1307 = vmatpush1.bf16.msra.mxu0 0
        %1308 = vmatprep.subr.bf16.mxu0 0
        %1309 = vmatpush1.bf16.msra.mxu0 0
        %1310 = vmatprep.subr.bf16.mxu0 0
        %1311 = vmatpush1.bf16.msra.mxu0 0
        %1312 = vmatprep.subr.bf16.mxu0 0
        %1313 = vmatpush1.bf16.msra.mxu0 0
        %1314 = vmatprep.mubr.bf16.mxu0 0
        %1315 = vmatmul.mubr.bf16.gmra.mrb[0].mxu0 %v1277
        %v1316 = vpop.f32.mrb[0].mxu0
        %v1317 = vadd.f32 0.0, %v1316
        %v1318 = vpop.f32.mrb[0].mxu0
        %v1319 = vpop.f32.mrb[0].mxu0
        %v1320 = vadd.f32 0.0, %v1319
        %v1321 = vpop.f32.mrb[0].mxu0
        %1322 = vdwg.mxu0
        %v1324 = vsel %vm837, %v1054, 0
        %v1327 = vsel %vm962, %v702, 0
        %1329 = vmatprep.subr.bf16.mxu0 0
        %1330 = vmatpush1.bf16.msra.mxu0 %v1327
        %1331 = vmatprep.subr.bf16.mxu0 0
        %1332 = vmatpush1.bf16.msra.mxu0 0
        %1333 = vmatprep.subr.bf16.mxu0 0
        %1334 = vmatpush1.bf16.msra.mxu0 0
        %1335 = vmatprep.subr.bf16.mxu0 0
        %1336 = vmatpush1.bf16.msra.mxu0 0
        %1337 = vmatprep.subr.bf16.mxu0 0
        %1338 = vmatpush1.bf16.msra.mxu0 0
        %1339 = vmatprep.subr.bf16.mxu0 0
        %1340 = vmatpush1.bf16.msra.mxu0 0
        %1341 = vmatprep.subr.bf16.mxu0 0
        %1342 = vmatpush1.bf16.msra.mxu0 0
        %1343 = vmatprep.subr.bf16.mxu0 0
        %1344 = vmatpush1.bf16.msra.mxu0 0
        %1345 = vmatprep.subr.bf16.mxu0 0
        %1346 = vmatpush1.bf16.msra.mxu0 0
        %1347 = vmatprep.subr.bf16.mxu0 0
        %1348 = vmatpush1.bf16.msra.mxu0 0
        %1349 = vmatprep.subr.bf16.mxu0 0
        %1350 = vmatpush1.bf16.msra.mxu0 0
        %1351 = vmatprep.subr.bf16.mxu0 0
        %1352 = vmatpush1.bf16.msra.mxu0 0
        %1353 = vmatprep.subr.bf16.mxu0 0
        %1354 = vmatpush1.bf16.msra.mxu0 0
        %1355 = vmatprep.subr.bf16.mxu0 0
        %1356 = vmatpush1.bf16.msra.mxu0 0
        %1357 = vmatprep.subr.bf16.mxu0 0
        %1358 = vmatpush1.bf16.msra.mxu0 0
        %1359 = vmatprep.subr.bf16.mxu0 0
        %1360 = vmatpush1.bf16.msra.mxu0 0
        %1361 = vmatprep.mubr.bf16.mxu0 0
        %1362 = vmatmul.mubr.bf16.gmra.mrb[0].mxu0 %v1324
        %v1363 = vpop.f32.mrb[0].mxu0
        %v1364 = vadd.f32 %v1317, %v1363
        %v1365 = vpop.f32.mrb[0].mxu0
        %v1366 = vpop.f32.mrb[0].mxu0
        %v1367 = vadd.f32 %v1320, %v1366
        %v1368 = vpop.f32.mrb[0].mxu0
        %1369 = vdwg.mxu0
        %1370 = vrot.lane.b32.xlu0 %v818, 112
        %v1371 = vpop.permute.xlu0 %1370
        %1372 = vrot.lane.b32.xlu0 %v834, 80
        %v1373 = vpop.permute.xlu0 %1372
        %v1375 = vsel %vm837, %v1371, 0
        %v1378 = vsel %vm837, %v1373, 0
        %1380 = vmatprep.subr.bf16.mxu0 0
        %1381 = vmatpush1.bf16.xpose.msra.mxu0 %v1378
        %1382 = vmatprep.subr.bf16.mxu0 0
        %1383 = vmatpush1.bf16.xpose.msra.mxu0 0
        %1384 = vmatprep.subr.bf16.mxu0 0
        %1385 = vmatpush1.bf16.xpose.msra.mxu0 0
        %1386 = vmatprep.subr.bf16.mxu0 0
        %1387 = vmatpush1.bf16.xpose.msra.mxu0 0
        %1388 = vmatprep.subr.bf16.mxu0 0
        %1389 = vmatpush1.bf16.xpose.msra.mxu0 0
        %1390 = vmatprep.subr.bf16.mxu0 0
        %1391 = vmatpush1.bf16.xpose.msra.mxu0 0
        %1392 = vmatprep.subr.bf16.mxu0 0
        %1393 = vmatpush1.bf16.xpose.msra.mxu0 0
        %1394 = vmatprep.subr.bf16.mxu0 0
        %1395 = vmatpush1.bf16.xpose.msra.mxu0 0
        %1396 = vmatprep.subr.bf16.mxu0 0
        %1397 = vmatpush1.bf16.xpose.msra.mxu0 0
        %1398 = vmatprep.subr.bf16.mxu0 0
        %1399 = vmatpush1.bf16.xpose.msra.mxu0 0
        %1400 = vmatprep.subr.bf16.mxu0 0
        %1401 = vmatpush1.bf16.xpose.msra.mxu0 0
        %1402 = vmatprep.subr.bf16.mxu0 0
        %1403 = vmatpush1.bf16.xpose.msra.mxu0 0
        %1404 = vmatprep.subr.bf16.mxu0 0
        %1405 = vmatpush1.bf16.xpose.msra.mxu0 0
        %1406 = vmatprep.subr.bf16.mxu0 0
        %1407 = vmatpush1.bf16.xpose.msra.mxu0 0
        %1408 = vmatprep.subr.bf16.mxu0 0
        %1409 = vmatpush1.bf16.xpose.msra.mxu0 0
        %1410 = vmatprep.subr.bf16.mxu0 0
        %1411 = vmatpush1.bf16.xpose.msra.mxu0 0
        %1412 = vmatprep.mubr.bf16.mxu0 0
        %1413 = vmatmul.mubr.bf16.gmra.mrb[0].mxu0 %v1375
        %v1414 = vpop.f32.mrb[0].mxu0
        %v1415 = vadd.f32 %v827, %v1414
        %v1416 = vpop.f32.mrb[0].mxu0
        %v1417 = vpop.f32.mrb[0].mxu0
        %v1418 = vpop.f32.mrb[0].mxu0
        %1419 = vdwg.mxu0
        %1420 = vrot.lane.b32.xlu0 %v819, 112
        %v1421 = vpop.permute.xlu0 %1420
        %1422 = vrot.lane.b32.xlu0 %v884, 80
        %v1423 = vpop.permute.xlu0 %1422
        %v1425 = vsel %vm837, %v1421, 0
        %v1428 = vsel %vm837, %v1423, 0
        %1430 = vmatprep.subr.bf16.mxu0 0
        %1431 = vmatpush1.bf16.xpose.msra.mxu0 %v1428
        %1432 = vmatprep.subr.bf16.mxu0 0
        %1433 = vmatpush1.bf16.xpose.msra.mxu0 0
        %1434 = vmatprep.subr.bf16.mxu0 0
        %1435 = vmatpush1.bf16.xpose.msra.mxu0 0
        %1436 = vmatprep.subr.bf16.mxu0 0
        %1437 = vmatpush1.bf16.xpose.msra.mxu0 0
        %1438 = vmatprep.subr.bf16.mxu0 0
        %1439 = vmatpush1.bf16.xpose.msra.mxu0 0
        %1440 = vmatprep.subr.bf16.mxu0 0
        %1441 = vmatpush1.bf16.xpose.msra.mxu0 0
        %1442 = vmatprep.subr.bf16.mxu0 0
        %1443 = vmatpush1.bf16.xpose.msra.mxu0 0
        %1444 = vmatprep.subr.bf16.mxu0 0
        %1445 = vmatpush1.bf16.xpose.msra.mxu0 0
        %1446 = vmatprep.subr.bf16.mxu0 0
        %1447 = vmatpush1.bf16.xpose.msra.mxu0 0
        %1448 = vmatprep.subr.bf16.mxu0 0
        %1449 = vmatpush1.bf16.xpose.msra.mxu0 0
        %1450 = vmatprep.subr.bf16.mxu0 0
        %1451 = vmatpush1.bf16.xpose.msra.mxu0 0
        %1452 = vmatprep.subr.bf16.mxu0 0
        %1453 = vmatpush1.bf16.xpose.msra.mxu0 0
        %1454 = vmatprep.subr.bf16.mxu0 0
        %1455 = vmatpush1.bf16.xpose.msra.mxu0 0
        %1456 = vmatprep.subr.bf16.mxu0 0
        %1457 = vmatpush1.bf16.xpose.msra.mxu0 0
        %1458 = vmatprep.subr.bf16.mxu0 0
        %1459 = vmatpush1.bf16.xpose.msra.mxu0 0
        %1460 = vmatprep.subr.bf16.mxu0 0
        %1461 = vmatpush1.bf16.xpose.msra.mxu0 0
        %1462 = vmatprep.mubr.bf16.mxu0 0
        %1463 = vmatmul.mubr.bf16.gmra.mrb[0].mxu0 %v1425
        %v1464 = vpop.f32.mrb[0].mxu0
        %v1465 = vadd.f32 %v831, %v1464
        %v1466 = vpop.f32.mrb[0].mxu0
        %v1467 = vpop.f32.mrb[0].mxu0
        %v1468 = vpop.f32.mrb[0].mxu0
        %1469 = vdwg.mxu0
        %v1470 = vsel %vm837, %v1415, -inf
        %1471 = vmax.xlane.f32.xlu0 %v1470
        %v1472 = vpop.xlane.xlu0 %1471
        %v1473 = vsel %vm837, %v1465, -inf
        %1474 = vmax.xlane.f32.xlu0 %v1473
        %v1475 = vpop.xlane.xlu0 %1474
        %v1476 = vsub.f32 %v1415, %v1472
        %v1477 = vsub.f32 %v1465, %v1475
        %v1478 = vmul.f32 %v1476, 1.442695
        %v1479 = vpow.pop %v1478
        %v1480 = vmul.f32 %v1477, 1.442695
        %v1481 = vpow.pop %v1480
        %v1482 = vsel %vm837, %v1479, 0.0
        %1483 = vadd.xlane.f32.xlu0 %v1482
        %v1484 = vpop.xlane.xlu0 %1483
        %v1485 = vsel %vm837, %v1481, 0.0
        %1486 = vadd.xlane.f32.xlu0 %v1485
        %v1487 = vpop.xlane.xlu0 %1486
        %v1488 = vrcp.pop %v1484
        %v1489 = vrcp.pop %v1487
        %v1490 = vmul.f32 %v1479, %v1488
        %v1491 = vmul.f32 %v1481, %v1489
        %v1492 = vpack.c.bf16 %v1490, %v1490
        %v1493 = vpack.c.bf16 %v1491, %v1491
        %1494 = vrot.lane.b32.xlu0 %v834, 48
        %v1495 = vpop.permute.xlu0 %1494
        %v1497 = vsel %vm837, %v1492, 0
        %v1500 = vsel %vm962, %v1495, 0
        %1502 = vmatprep.subr.bf16.mxu0 0
        %1503 = vmatpush1.bf16.msra.mxu0 %v1500
        %1504 = vmatprep.subr.bf16.mxu0 0
        %1505 = vmatpush1.bf16.msra.mxu0 0
        %1506 = vmatprep.subr.bf16.mxu0 0
        %1507 = vmatpush1.bf16.msra.mxu0 0
        %1508 = vmatprep.subr.bf16.mxu0 0
        %1509 = vmatpush1.bf16.msra.mxu0 0
        %1510 = vmatprep.subr.bf16.mxu0 0
        %1511 = vmatpush1.bf16.msra.mxu0 0
        %1512 = vmatprep.subr.bf16.mxu0 0
        %1513 = vmatpush1.bf16.msra.mxu0 0
        %1514 = vmatprep.subr.bf16.mxu0 0
        %1515 = vmatpush1.bf16.msra.mxu0 0
        %1516 = vmatprep.subr.bf16.mxu0 0
        %1517 = vmatpush1.bf16.msra.mxu0 0
        %1518 = vmatprep.subr.bf16.mxu0 0
        %1519 = vmatpush1.bf16.msra.mxu0 0
        %1520 = vmatprep.subr.bf16.mxu0 0
        %1521 = vmatpush1.bf16.msra.mxu0 0
        %1522 = vmatprep.subr.bf16.mxu0 0
        %1523 = vmatpush1.bf16.msra.mxu0 0
        %1524 = vmatprep.subr.bf16.mxu0 0
        %1525 = vmatpush1.bf16.msra.mxu0 0
        %1526 = vmatprep.subr.bf16.mxu0 0
        %1527 = vmatpush1.bf16.msra.mxu0 0
        %1528 = vmatprep.subr.bf16.mxu0 0
        %1529 = vmatpush1.bf16.msra.mxu0 0
        %1530 = vmatprep.subr.bf16.mxu0 0
        %1531 = vmatpush1.bf16.msra.mxu0 0
        %1532 = vmatprep.subr.bf16.mxu0 0
        %1533 = vmatpush1.bf16.msra.mxu0 0
        %1534 = vmatprep.mubr.bf16.mxu0 0
        %1535 = vmatmul.mubr.bf16.gmra.mrb[0].mxu0 %v1497
        %v1536 = vpop.f32.mrb[0].mxu0
        %v1537 = vadd.f32 0.0, %v1536
        %v1538 = vpop.f32.mrb[0].mxu0
        %v1539 = vpop.f32.mrb[0].mxu0
        %v1540 = vpop.f32.mrb[0].mxu0
        %1541 = vdwg.mxu0
        %1542 = vrot.lane.b32.xlu0 %v884, 48
        %v1543 = vpop.permute.xlu0 %1542
        %v1545 = vsel %vm837, %v1493, 0
        %v1548 = vsel %vm962, %v1543, 0
        %1550 = vmatprep.subr.bf16.mxu0 0
        %1551 = vmatpush1.bf16.msra.mxu0 %v1548
        %1552 = vmatprep.subr.bf16.mxu0 0
        %1553 = vmatpush1.bf16.msra.mxu0 0
        %1554 = vmatprep.subr.bf16.mxu0 0
        %1555 = vmatpush1.bf16.msra.mxu0 0
        %1556 = vmatprep.subr.bf16.mxu0 0
        %1557 = vmatpush1.bf16.msra.mxu0 0
        %1558 = vmatprep.subr.bf16.mxu0 0
        %1559 = vmatpush1.bf16.msra.mxu0 0
        %1560 = vmatprep.subr.bf16.mxu0 0
        %1561 = vmatpush1.bf16.msra.mxu0 0
        %1562 = vmatprep.subr.bf16.mxu0 0
        %1563 = vmatpush1.bf16.msra.mxu0 0
        %1564 = vmatprep.subr.bf16.mxu0 0
        %1565 = vmatpush1.bf16.msra.mxu0 0
        %1566 = vmatprep.subr.bf16.mxu0 0
        %1567 = vmatpush1.bf16.msra.mxu0 0
        %1568 = vmatprep.subr.bf16.mxu0 0
        %1569 = vmatpush1.bf16.msra.mxu0 0
        %1570 = vmatprep.subr.bf16.mxu0 0
        %1571 = vmatpush1.bf16.msra.mxu0 0
        %1572 = vmatprep.subr.bf16.mxu0 0
        %1573 = vmatpush1.bf16.msra.mxu0 0
        %1574 = vmatprep.subr.bf16.mxu0 0
        %1575 = vmatpush1.bf16.msra.mxu0 0
        %1576 = vmatprep.subr.bf16.mxu0 0
        %1577 = vmatpush1.bf16.msra.mxu0 0
        %1578 = vmatprep.subr.bf16.mxu0 0
        %1579 = vmatpush1.bf16.msra.mxu0 0
        %1580 = vmatprep.subr.bf16.mxu0 0
        %1581 = vmatpush1.bf16.msra.mxu0 0
        %1582 = vmatprep.mubr.bf16.mxu0 0
        %1583 = vmatmul.mubr.bf16.gmra.mrb[0].mxu0 %v1545
        %v1584 = vpop.f32.mrb[0].mxu0
        %v1585 = vadd.f32 0.0, %v1584
        %v1586 = vpop.f32.mrb[0].mxu0
        %v1587 = vpop.f32.mrb[0].mxu0
        %v1588 = vpop.f32.mrb[0].mxu0
        %1589 = vdwg.mxu0
        %v1590 = vpack.c.bf16 %v1585, %v1537
        %v1592 = vsel %vm837, %v1590, 0
        %v1595 = vsel %vm962, %v704, 0
        %1597 = vmatprep.subr.bf16.mxu0 0
        %1598 = vmatpush1.bf16.msra.mxu0 %v1595
        %1599 = vmatprep.subr.bf16.mxu0 0
        %1600 = vmatpush1.bf16.msra.mxu0 0
        %1601 = vmatprep.subr.bf16.mxu0 0
        %1602 = vmatpush1.bf16.msra.mxu0 0
        %1603 = vmatprep.subr.bf16.mxu0 0
        %1604 = vmatpush1.bf16.msra.mxu0 0
        %1605 = vmatprep.subr.bf16.mxu0 0
        %1606 = vmatpush1.bf16.msra.mxu0 0
        %1607 = vmatprep.subr.bf16.mxu0 0
        %1608 = vmatpush1.bf16.msra.mxu0 0
        %1609 = vmatprep.subr.bf16.mxu0 0
        %1610 = vmatpush1.bf16.msra.mxu0 0
        %1611 = vmatprep.subr.bf16.mxu0 0
        %1612 = vmatpush1.bf16.msra.mxu0 0
        %1613 = vmatprep.subr.bf16.mxu0 0
        %1614 = vmatpush1.bf16.msra.mxu0 0
        %1615 = vmatprep.subr.bf16.mxu0 0
        %1616 = vmatpush1.bf16.msra.mxu0 0
        %1617 = vmatprep.subr.bf16.mxu0 0
        %1618 = vmatpush1.bf16.msra.mxu0 0
        %1619 = vmatprep.subr.bf16.mxu0 0
        %1620 = vmatpush1.bf16.msra.mxu0 0
        %1621 = vmatprep.subr.bf16.mxu0 0
        %1622 = vmatpush1.bf16.msra.mxu0 0
        %1623 = vmatprep.subr.bf16.mxu0 0
        %1624 = vmatpush1.bf16.msra.mxu0 0
        %1625 = vmatprep.subr.bf16.mxu0 0
        %1626 = vmatpush1.bf16.msra.mxu0 0
        %1627 = vmatprep.subr.bf16.mxu0 0
        %1628 = vmatpush1.bf16.msra.mxu0 0
        %1629 = vmatprep.mubr.bf16.mxu0 0
        %1630 = vmatmul.mubr.bf16.gmra.mrb[0].mxu0 %v1592
        %v1631 = vpop.f32.mrb[0].mxu0
        %v1632 = vadd.f32 0.0, %v1631
        %v1633 = vpop.f32.mrb[0].mxu0
        %v1634 = vpop.f32.mrb[0].mxu0
        %v1635 = vadd.f32 0.0, %v1634
        %v1636 = vpop.f32.mrb[0].mxu0
        %1637 = vdwg.mxu0
        %v1638 = vadd.f32 %v1364, %v1632
        %v1639 = vadd.f32 %v1367, %v1635
        %1640 = vrot.lane.b32.xlu0 %v818, 104
        %v1641 = vpop.permute.xlu0 %1640
        %1642 = vrot.lane.b32.xlu0 %v834, 72
        %v1643 = vpop.permute.xlu0 %1642
        %v1645 = vsel %vm837, %v1641, 0
        %v1648 = vsel %vm837, %v1643, 0
        %1650 = vmatprep.subr.bf16.mxu0 0
        %1651 = vmatpush1.bf16.xpose.msra.mxu0 %v1648
        %1652 = vmatprep.subr.bf16.mxu0 0
        %1653 = vmatpush1.bf16.xpose.msra.mxu0 0
        %1654 = vmatprep.subr.bf16.mxu0 0
        %1655 = vmatpush1.bf16.xpose.msra.mxu0 0
        %1656 = vmatprep.subr.bf16.mxu0 0
        %1657 = vmatpush1.bf16.xpose.msra.mxu0 0
        %1658 = vmatprep.subr.bf16.mxu0 0
        %1659 = vmatpush1.bf16.xpose.msra.mxu0 0
        %1660 = vmatprep.subr.bf16.mxu0 0
        %1661 = vmatpush1.bf16.xpose.msra.mxu0 0
        %1662 = vmatprep.subr.bf16.mxu0 0
        %1663 = vmatpush1.bf16.xpose.msra.mxu0 0
        %1664 = vmatprep.subr.bf16.mxu0 0
        %1665 = vmatpush1.bf16.xpose.msra.mxu0 0
        %1666 = vmatprep.subr.bf16.mxu0 0
        %1667 = vmatpush1.bf16.xpose.msra.mxu0 0
        %1668 = vmatprep.subr.bf16.mxu0 0
        %1669 = vmatpush1.bf16.xpose.msra.mxu0 0
        %1670 = vmatprep.subr.bf16.mxu0 0
        %1671 = vmatpush1.bf16.xpose.msra.mxu0 0
        %1672 = vmatprep.subr.bf16.mxu0 0
        %1673 = vmatpush1.bf16.xpose.msra.mxu0 0
        %1674 = vmatprep.subr.bf16.mxu0 0
        %1675 = vmatpush1.bf16.xpose.msra.mxu0 0
        %1676 = vmatprep.subr.bf16.mxu0 0
        %1677 = vmatpush1.bf16.xpose.msra.mxu0 0
        %1678 = vmatprep.subr.bf16.mxu0 0
        %1679 = vmatpush1.bf16.xpose.msra.mxu0 0
        %1680 = vmatprep.subr.bf16.mxu0 0
        %1681 = vmatpush1.bf16.xpose.msra.mxu0 0
        %1682 = vmatprep.mubr.bf16.mxu0 0
        %1683 = vmatmul.mubr.bf16.gmra.mrb[0].mxu0 %v1645
        %v1684 = vpop.f32.mrb[0].mxu0
        %v1685 = vadd.f32 %v827, %v1684
        %v1686 = vpop.f32.mrb[0].mxu0
        %v1687 = vpop.f32.mrb[0].mxu0
        %v1688 = vpop.f32.mrb[0].mxu0
        %1689 = vdwg.mxu0
        %1690 = vrot.lane.b32.xlu0 %v819, 104
        %v1691 = vpop.permute.xlu0 %1690
        %1692 = vrot.lane.b32.xlu0 %v884, 72
        %v1693 = vpop.permute.xlu0 %1692
        %v1695 = vsel %vm837, %v1691, 0
        %v1698 = vsel %vm837, %v1693, 0
        %1700 = vmatprep.subr.bf16.mxu0 0
        %1701 = vmatpush1.bf16.xpose.msra.mxu0 %v1698
        %1702 = vmatprep.subr.bf16.mxu0 0
        %1703 = vmatpush1.bf16.xpose.msra.mxu0 0
        %1704 = vmatprep.subr.bf16.mxu0 0
        %1705 = vmatpush1.bf16.xpose.msra.mxu0 0
        %1706 = vmatprep.subr.bf16.mxu0 0
        %1707 = vmatpush1.bf16.xpose.msra.mxu0 0
        %1708 = vmatprep.subr.bf16.mxu0 0
        %1709 = vmatpush1.bf16.xpose.msra.mxu0 0
        %1710 = vmatprep.subr.bf16.mxu0 0
        %1711 = vmatpush1.bf16.xpose.msra.mxu0 0
        %1712 = vmatprep.subr.bf16.mxu0 0
        %1713 = vmatpush1.bf16.xpose.msra.mxu0 0
        %1714 = vmatprep.subr.bf16.mxu0 0
        %1715 = vmatpush1.bf16.xpose.msra.mxu0 0
        %1716 = vmatprep.subr.bf16.mxu0 0
        %1717 = vmatpush1.bf16.xpose.msra.mxu0 0
        %1718 = vmatprep.subr.bf16.mxu0 0
        %1719 = vmatpush1.bf16.xpose.msra.mxu0 0
        %1720 = vmatprep.subr.bf16.mxu0 0
        %1721 = vmatpush1.bf16.xpose.msra.mxu0 0
        %1722 = vmatprep.subr.bf16.mxu0 0
        %1723 = vmatpush1.bf16.xpose.msra.mxu0 0
        %1724 = vmatprep.subr.bf16.mxu0 0
        %1725 = vmatpush1.bf16.xpose.msra.mxu0 0
        %1726 = vmatprep.subr.bf16.mxu0 0
        %1727 = vmatpush1.bf16.xpose.msra.mxu0 0
        %1728 = vmatprep.subr.bf16.mxu0 0
        %1729 = vmatpush1.bf16.xpose.msra.mxu0 0
        %1730 = vmatprep.subr.bf16.mxu0 0
        %1731 = vmatpush1.bf16.xpose.msra.mxu0 0
        %1732 = vmatprep.mubr.bf16.mxu0 0
        %1733 = vmatmul.mubr.bf16.gmra.mrb[0].mxu0 %v1695
        %v1734 = vpop.f32.mrb[0].mxu0
        %v1735 = vadd.f32 %v831, %v1734
        %v1736 = vpop.f32.mrb[0].mxu0
        %v1737 = vpop.f32.mrb[0].mxu0
        %v1738 = vpop.f32.mrb[0].mxu0
        %1739 = vdwg.mxu0
        %v1740 = vsel %vm837, %v1685, -inf
        %1741 = vmax.xlane.f32.xlu0 %v1740
        %v1742 = vpop.xlane.xlu0 %1741
        %v1743 = vsel %vm837, %v1735, -inf
        %1744 = vmax.xlane.f32.xlu0 %v1743
        %v1745 = vpop.xlane.xlu0 %1744
        %v1746 = vsub.f32 %v1685, %v1742
        %v1747 = vsub.f32 %v1735, %v1745
        %v1748 = vmul.f32 %v1746, 1.442695
        %v1749 = vpow.pop %v1748
        %v1750 = vmul.f32 %v1747, 1.442695
        %v1751 = vpow.pop %v1750
        %v1752 = vsel %vm837, %v1749, 0.0
        %1753 = vadd.xlane.f32.xlu0 %v1752
        %v1754 = vpop.xlane.xlu0 %1753
        %v1755 = vsel %vm837, %v1751, 0.0
        %1756 = vadd.xlane.f32.xlu0 %v1755
        %v1757 = vpop.xlane.xlu0 %1756
        %v1758 = vrcp.pop %v1754
        %v1759 = vrcp.pop %v1757
        %v1760 = vmul.f32 %v1749, %v1758
        %v1761 = vmul.f32 %v1751, %v1759
        %v1762 = vpack.c.bf16 %v1760, %v1760
        %v1763 = vpack.c.bf16 %v1761, %v1761
        %1764 = vrot.lane.b32.xlu0 %v834, 40
        %v1765 = vpop.permute.xlu0 %1764
        %v1767 = vsel %vm837, %v1762, 0
        %v1770 = vsel %vm962, %v1765, 0
        %1772 = vmatprep.subr.bf16.mxu0 0
        %1773 = vmatpush1.bf16.msra.mxu0 %v1770
        %1774 = vmatprep.subr.bf16.mxu0 0
        %1775 = vmatpush1.bf16.msra.mxu0 0
        %1776 = vmatprep.subr.bf16.mxu0 0
        %1777 = vmatpush1.bf16.msra.mxu0 0
        %1778 = vmatprep.subr.bf16.mxu0 0
        %1779 = vmatpush1.bf16.msra.mxu0 0
        %1780 = vmatprep.subr.bf16.mxu0 0
        %1781 = vmatpush1.bf16.msra.mxu0 0
        %1782 = vmatprep.subr.bf16.mxu0 0
        %1783 = vmatpush1.bf16.msra.mxu0 0
        %1784 = vmatprep.subr.bf16.mxu0 0
        %1785 = vmatpush1.bf16.msra.mxu0 0
        %1786 = vmatprep.subr.bf16.mxu0 0
        %1787 = vmatpush1.bf16.msra.mxu0 0
        %1788 = vmatprep.subr.bf16.mxu0 0
        %1789 = vmatpush1.bf16.msra.mxu0 0
        %1790 = vmatprep.subr.bf16.mxu0 0
        %1791 = vmatpush1.bf16.msra.mxu0 0
        %1792 = vmatprep.subr.bf16.mxu0 0
        %1793 = vmatpush1.bf16.msra.mxu0 0
        %1794 = vmatprep.subr.bf16.mxu0 0
        %1795 = vmatpush1.bf16.msra.mxu0 0
        %1796 = vmatprep.subr.bf16.mxu0 0
        %1797 = vmatpush1.bf16.msra.mxu0 0
        %1798 = vmatprep.subr.bf16.mxu0 0
        %1799 = vmatpush1.bf16.msra.mxu0 0
        %1800 = vmatprep.subr.bf16.mxu0 0
        %1801 = vmatpush1.bf16.msra.mxu0 0
        %1802 = vmatprep.subr.bf16.mxu0 0
        %1803 = vmatpush1.bf16.msra.mxu0 0
        %1804 = vmatprep.mubr.bf16.mxu0 0
        %1805 = vmatmul.mubr.bf16.gmra.mrb[0].mxu0 %v1767
        %v1806 = vpop.f32.mrb[0].mxu0
        %v1807 = vadd.f32 0.0, %v1806
        %v1808 = vpop.f32.mrb[0].mxu0
        %v1809 = vpop.f32.mrb[0].mxu0
        %v1810 = vpop.f32.mrb[0].mxu0
        %1811 = vdwg.mxu0
        %1812 = vrot.lane.b32.xlu0 %v884, 40
        %v1813 = vpop.permute.xlu0 %1812
        %v1815 = vsel %vm837, %v1763, 0
        %v1818 = vsel %vm962, %v1813, 0
        %1820 = vmatprep.subr.bf16.mxu0 0
        %1821 = vmatpush1.bf16.msra.mxu0 %v1818
        %1822 = vmatprep.subr.bf16.mxu0 0
        %1823 = vmatpush1.bf16.msra.mxu0 0
        %1824 = vmatprep.subr.bf16.mxu0 0
        %1825 = vmatpush1.bf16.msra.mxu0 0
        %1826 = vmatprep.subr.bf16.mxu0 0
        %1827 = vmatpush1.bf16.msra.mxu0 0
        %1828 = vmatprep.subr.bf16.mxu0 0
        %1829 = vmatpush1.bf16.msra.mxu0 0
        %1830 = vmatprep.subr.bf16.mxu0 0
        %1831 = vmatpush1.bf16.msra.mxu0 0
        %1832 = vmatprep.subr.bf16.mxu0 0
        %1833 = vmatpush1.bf16.msra.mxu0 0
        %1834 = vmatprep.subr.bf16.mxu0 0
        %1835 = vmatpush1.bf16.msra.mxu0 0
        %1836 = vmatprep.subr.bf16.mxu0 0
        %1837 = vmatpush1.bf16.msra.mxu0 0
        %1838 = vmatprep.subr.bf16.mxu0 0
        %1839 = vmatpush1.bf16.msra.mxu0 0
        %1840 = vmatprep.subr.bf16.mxu0 0
        %1841 = vmatpush1.bf16.msra.mxu0 0
        %1842 = vmatprep.subr.bf16.mxu0 0
        %1843 = vmatpush1.bf16.msra.mxu0 0
        %1844 = vmatprep.subr.bf16.mxu0 0
        %1845 = vmatpush1.bf16.msra.mxu0 0
        %1846 = vmatprep.subr.bf16.mxu0 0
        %1847 = vmatpush1.bf16.msra.mxu0 0
        %1848 = vmatprep.subr.bf16.mxu0 0
        %1849 = vmatpush1.bf16.msra.mxu0 0
        %1850 = vmatprep.subr.bf16.mxu0 0
        %1851 = vmatpush1.bf16.msra.mxu0 0
        %1852 = vmatprep.mubr.bf16.mxu0 0
        %1853 = vmatmul.mubr.bf16.gmra.mrb[0].mxu0 %v1815
        %v1854 = vpop.f32.mrb[0].mxu0
        %v1855 = vadd.f32 0.0, %v1854
        %v1856 = vpop.f32.mrb[0].mxu0
        %v1857 = vpop.f32.mrb[0].mxu0
        %v1858 = vpop.f32.mrb[0].mxu0
        %1859 = vdwg.mxu0
        %v1860 = vpack.c.bf16 %v1855, %v1807
        %v1862 = vsel %vm837, %v1860, 0
        %v1865 = vsel %vm962, %v705, 0
        %1867 = vmatprep.subr.bf16.mxu0 0
        %1868 = vmatpush1.bf16.msra.mxu0 %v1865
        %1869 = vmatprep.subr.bf16.mxu0 0
        %1870 = vmatpush1.bf16.msra.mxu0 0
        %1871 = vmatprep.subr.bf16.mxu0 0
        %1872 = vmatpush1.bf16.msra.mxu0 0
        %1873 = vmatprep.subr.bf16.mxu0 0
        %1874 = vmatpush1.bf16.msra.mxu0 0
        %1875 = vmatprep.subr.bf16.mxu0 0
        %1876 = vmatpush1.bf16.msra.mxu0 0
        %1877 = vmatprep.subr.bf16.mxu0 0
        %1878 = vmatpush1.bf16.msra.mxu0 0
        %1879 = vmatprep.subr.bf16.mxu0 0
        %1880 = vmatpush1.bf16.msra.mxu0 0
        %1881 = vmatprep.subr.bf16.mxu0 0
        %1882 = vmatpush1.bf16.msra.mxu0 0
        %1883 = vmatprep.subr.bf16.mxu0 0
        %1884 = vmatpush1.bf16.msra.mxu0 0
        %1885 = vmatprep.subr.bf16.mxu0 0
        %1886 = vmatpush1.bf16.msra.mxu0 0
        %1887 = vmatprep.subr.bf16.mxu0 0
        %1888 = vmatpush1.bf16.msra.mxu0 0
        %1889 = vmatprep.subr.bf16.mxu0 0
        %1890 = vmatpush1.bf16.msra.mxu0 0
        %1891 = vmatprep.subr.bf16.mxu0 0
        %1892 = vmatpush1.bf16.msra.mxu0 0
        %1893 = vmatprep.subr.bf16.mxu0 0
        %1894 = vmatpush1.bf16.msra.mxu0 0
        %1895 = vmatprep.subr.bf16.mxu0 0
        %1896 = vmatpush1.bf16.msra.mxu0 0
        %1897 = vmatprep.subr.bf16.mxu0 0
        %1898 = vmatpush1.bf16.msra.mxu0 0
        %1899 = vmatprep.mubr.bf16.mxu0 0
        %1900 = vmatmul.mubr.bf16.gmra.mrb[0].mxu0 %v1862
        %v1901 = vpop.f32.mrb[0].mxu0
        %v1902 = vadd.f32 0.0, %v1901
        %v1903 = vpop.f32.mrb[0].mxu0
        %v1904 = vpop.f32.mrb[0].mxu0
        %v1905 = vadd.f32 0.0, %v1904
        %v1906 = vpop.f32.mrb[0].mxu0
        %1907 = vdwg.mxu0
        %v1908 = vadd.f32 %v1638, %v1902
        %v1909 = vadd.f32 %v1639, %v1905
        %v1911 = vlaneseq
        %v1912 = vshrl.u32 %v1911, 7
        %v1913 = vsub.s32 0, %v1912
        %v1914 = vrot.slane %v706, %v1913
        %v1916 = vadd.f32 %v1908, %v1914
        %v1917 = vadd.f32 %v1909, %v1914
        %v1918 = vadd.f32 %v722, %v1916
        %v1919 = vadd.f32 %v723, %v1917
        %v1920 = vsel %vm767, %v1918, 0.0
        %1921 = vadd.xlane.f32.xlu0 %v1920
        %v1922 = vpop.xlane.xlu0 %1921
        %v1923 = vsel %vm767, %v1919, 0.0
        %1924 = vadd.xlane.f32.xlu0 %v1923
        %v1925 = vpop.xlane.xlu0 %1924
        %v1926 = vrcp.pop 32.0
        %v1927 = vmul.f32 %v1922, %v1926
        %v1928 = vmul.f32 %v1925, %v1926
        %v1929 = vsub.f32 %v1918, %v1927
        %v1930 = vsub.f32 %v1919, %v1928
        %v1931 = vmul.f32 %v1929, %v1929
        %v1932 = vmul.f32 %v1930, %v1930
        %v1933 = vsel %vm767, %v1931, 0.0
        %1934 = vadd.xlane.f32.xlu0 %v1933
        %v1935 = vpop.xlane.xlu0 %1934
        %v1936 = vsel %vm767, %v1932, 0.0
        %1937 = vadd.xlane.f32.xlu0 %v1936
        %v1938 = vpop.xlane.xlu0 %1937
        %v1939 = vmul.f32 %v1935, %v1926
        %v1940 = vmul.f32 %v1938, %v1926
        %v1941 = vadd.f32 %v1939, 1e-05
        %v1942 = vadd.f32 %v1940, 1e-05
        %v1943 = vrsqrt.pop %v1941
        %v1944 = vrsqrt.pop %v1942
        %v1945 = vmul.f32 %v1929, %v1943
        %v1946 = vmul.f32 %v1930, %v1944
        %v1947 = vlaneseq
        %v1948 = vshrl.u32 %v1947, 7
        %v1949 = vsub.s32 0, %v1948
        %v1950 = vrot.slane %v721, %v1949
        %v1951 = vmul.f32 %v1945, %v1950
        %v1952 = vmul.f32 %v1946, %v1950
        %v1953 = vlaneseq
        %v1954 = vshrl.u32 %v1953, 7
        %v1955 = vsub.s32 1, %v1954
        %v1956 = vrot.slane %v721, %v1955
        %v1957 = vadd.f32 %v1951, %v1956
        %v1958 = vadd.f32 %v1952, %v1956
        %v1959 = vpack.c.bf16 %v1958, %v1957
        %v1961 = vlaneseq
        %v1962 = vshrl.u32 %v1961, 7
        %v1963 = vsub.s32 0, %v1962
        %v1964 = vrot.slane %v711, %v1963
        %v1970 = vunpack.c.l.b16 %v707
        %v1971 = vunpack.c.l.b16 %v708
        %v1972 = vunpack.c.l.b16 %v709
        %v1973 = vunpack.c.l.b16 %v710
        %v1974 = vpack.c.b16 %v1971, %v1970
        %v1975 = vpack.c.b16 %v1973, %v1972
        %v1979 = vsel %vm767, %v1959, 0
        %1981 = vmatprep.subr.bf16.mxu0 0
        %1982 = vmatpush1.bf16.msra.mxu0 %v1974
        %1983 = vmatprep.subr.bf16.mxu0 0
        %1984 = vmatpush1.bf16.msra.mxu0 %v1975
        %1985 = vmatprep.subr.bf16.mxu0 0
        %1986 = vmatpush1.bf16.msra.mxu0 0
        %1987 = vmatprep.subr.bf16.mxu0 0
        %1988 = vmatpush1.bf16.msra.mxu0 0
        %1989 = vmatprep.subr.bf16.mxu0 0
        %1990 = vmatpush1.bf16.msra.mxu0 0
        %1991 = vmatprep.subr.bf16.mxu0 0
        %1992 = vmatpush1.bf16.msra.mxu0 0
        %1993 = vmatprep.subr.bf16.mxu0 0
        %1994 = vmatpush1.bf16.msra.mxu0 0
        %1995 = vmatprep.subr.bf16.mxu0 0
        %1996 = vmatpush1.bf16.msra.mxu0 0
        %1997 = vmatprep.subr.bf16.mxu0 0
        %1998 = vmatpush1.bf16.msra.mxu0 0
        %1999 = vmatprep.subr.bf16.mxu0 0
        %2000 = vmatpush1.bf16.msra.mxu0 0
        %2001 = vmatprep.subr.bf16.mxu0 0
        %2002 = vmatpush1.bf16.msra.mxu0 0
        %2003 = vmatprep.subr.bf16.mxu0 0
        %2004 = vmatpush1.bf16.msra.mxu0 0
        %2005 = vmatprep.subr.bf16.mxu0 0
        %2006 = vmatpush1.bf16.msra.mxu0 0
        %2007 = vmatprep.subr.bf16.mxu0 0
        %2008 = vmatpush1.bf16.msra.mxu0 0
        %2009 = vmatprep.subr.bf16.mxu0 0
        %2010 = vmatpush1.bf16.msra.mxu0 0
        %2011 = vmatprep.subr.bf16.mxu0 0
        %2012 = vmatpush1.bf16.msra.mxu0 0
        %2013 = vmatprep.mubr.bf16.mxu0 0
        %2014 = vmatmul.mubr.bf16.gmra.mrb[0].mxu0 %v1979
        %v2015 = vpop.f32.mrb[0].mxu0
        %v2016 = vadd.f32 %v1964, %v2015
        %v2017 = vpop.f32.mrb[0].mxu0
        %v2018 = vpop.f32.mrb[0].mxu0
        %v2019 = vadd.f32 %v1964, %v2018
        %v2020 = vpop.f32.mrb[0].mxu0
        %2021 = vdwg.mxu0
        %v2022 = vmax.f32 %v2016, 0.0
        %v2023 = vmax.f32 %v2019, 0.0
        %v2024 = vpack.c.bf16 %v2023, %v2022
        %v2026 = vlaneseq
        %v2027 = vshrl.u32 %v2026, 7
        %v2028 = vsub.s32 0, %v2027
        %v2029 = vrot.slane %v720, %v2028
        %v2039 = vunpack.c.l.b16 %v712
        %v2040 = vunpack.c.l.b16 %v713
        %v2041 = vunpack.c.l.b16 %v714
        %v2042 = vunpack.c.l.b16 %v715
        %v2043 = vunpack.c.l.b16 %v716
        %v2044 = vunpack.c.l.b16 %v717
        %v2045 = vunpack.c.l.b16 %v718
        %v2046 = vunpack.c.l.b16 %v719
        %v2047 = vpack.c.b16 %v2040, %v2039
        %v2048 = vpack.c.b16 %v2042, %v2041
        %v2049 = vpack.c.b16 %v2044, %v2043
        %v2050 = vpack.c.b16 %v2046, %v2045
        %vm2055 = vcmask 523264
        %v2057 = vsel %vm2055, %v2024, 0
        %2059 = vmatprep.subr.bf16.mxu0 0
        %2060 = vmatpush1.bf16.msra.mxu0 %v2047
        %2061 = vmatprep.subr.bf16.mxu0 0
        %2062 = vmatpush1.bf16.msra.mxu0 %v2048
        %2063 = vmatprep.subr.bf16.mxu0 0
        %2064 = vmatpush1.bf16.msra.mxu0 %v2049
        %2065 = vmatprep.subr.bf16.mxu0 0
        %2066 = vmatpush1.bf16.msra.mxu0 %v2050
        %2067 = vmatprep.subr.bf16.mxu0 0
        %2068 = vmatpush1.bf16.msra.mxu0 0
        %2069 = vmatprep.subr.bf16.mxu0 0
        %2070 = vmatpush1.bf16.msra.mxu0 0
        %2071 = vmatprep.subr.bf16.mxu0 0
        %2072 = vmatpush1.bf16.msra.mxu0 0
        %2073 = vmatprep.subr.bf16.mxu0 0
        %2074 = vmatpush1.bf16.msra.mxu0 0
        %2075 = vmatprep.subr.bf16.mxu0 0
        %2076 = vmatpush1.bf16.msra.mxu0 0
        %2077 = vmatprep.subr.bf16.mxu0 0
        %2078 = vmatpush1.bf16.msra.mxu0 0
        %2079 = vmatprep.subr.bf16.mxu0 0
        %2080 = vmatpush1.bf16.msra.mxu0 0
        %2081 = vmatprep.subr.bf16.mxu0 0
        %2082 = vmatpush1.bf16.msra.mxu0 0
        %2083 = vmatprep.subr.bf16.mxu0 0
        %2084 = vmatpush1.bf16.msra.mxu0 0
        %2085 = vmatprep.subr.bf16.mxu0 0
        %2086 = vmatpush1.bf16.msra.mxu0 0
        %2087 = vmatprep.subr.bf16.mxu0 0
        %2088 = vmatpush1.bf16.msra.mxu0 0
        %2089 = vmatprep.subr.bf16.mxu0 0
        %2090 = vmatpush1.bf16.msra.mxu0 0
        %2091 = vmatprep.mubr.bf16.mxu0 0
        %2092 = vmatmul.mubr.bf16.gmra.mrb[0].mxu0 %v2057
        %v2093 = vpop.f32.mrb[0].mxu0
        %v2094 = vadd.f32 %v2029, %v2093
        %v2095 = vpop.f32.mrb[0].mxu0
        %v2096 = vpop.f32.mrb[0].mxu0
        %v2097 = vadd.f32 %v2029, %v2096
        %v2098 = vpop.f32.mrb[0].mxu0
        %2099 = vdwg.mxu0
        %v2100 = vadd.f32 %v1957, %v2094
        %v2101 = vadd.f32 %v1958, %v2097
        %v2102 = vsel %vm767, %v2100, 0.0
        %2103 = vadd.xlane.f32.xlu0 %v2102
        %v2104 = vpop.xlane.xlu0 %2103
        %v2105 = vsel %vm767, %v2101, 0.0
        %2106 = vadd.xlane.f32.xlu0 %v2105
        %v2107 = vpop.xlane.xlu0 %2106
        %v2108 = vmul.f32 %v2104, %v1926
        %v2109 = vmul.f32 %v2107, %v1926
        %v2110 = vsub.f32 %v2100, %v2108
        %v2111 = vsub.f32 %v2101, %v2109
        %v2112 = vmul.f32 %v2110, %v2110
        %v2113 = vmul.f32 %v2111, %v2111
        %v2114 = vsel %vm767, %v2112, 0.0
        %2115 = vadd.xlane.f32.xlu0 %v2114
        %v2116 = vpop.xlane.xlu0 %2115
        %v2117 = vsel %vm767, %v2113, 0.0
        %2118 = vadd.xlane.f32.xlu0 %v2117
        %v2119 = vpop.xlane.xlu0 %2118
        %v2120 = vmul.f32 %v2116, %v1926
        %v2121 = vmul.f32 %v2119, %v1926
        %v2122 = vadd.f32 %v2120, 1e-05
        %v2123 = vadd.f32 %v2121, 1e-05
        %v2124 = vrsqrt.pop %v2122
        %v2125 = vrsqrt.pop %v2123
        %v2126 = vmul.f32 %v2110, %v2124
        %v2127 = vmul.f32 %v2111, %v2125
        %v2128 = vlaneseq
        %v2129 = vshrl.u32 %v2128, 7
        %v2130 = vsub.s32 2, %v2129
        %v2131 = vrot.slane %v721, %v2130
        %v2132 = vmul.f32 %v2126, %v2131
        %v2133 = vmul.f32 %v2127, %v2131
        %v2134 = vlaneseq
        %v2135 = vshrl.u32 %v2134, 7
        %v2136 = vsub.s32 3, %v2135
        %v2137 = vrot.slane %v721, %v2136
        %v2138 = vadd.f32 %v2132, %v2137
        %v2139 = vadd.f32 %v2133, %v2137
        %2140 = vst.msk [vmem:[#allocation2] sm:$0xff] %vm767, %v2138
        %2141 = vst.msk [vmem:[#allocation2 + $0x8] sm:$0xff] %vm767, %v2139
        %v2142 = vpack.c.bf16 %v2138, %v2138
        %v2143 = vpack.c.bf16 %v2139, %v2139
        %vm2144 = vcmask 257024
        %2145 = vst.msk [vmem:[#allocation17] sm:$0xf] %vm2144, %v2142
        %2146 = vst.msk [vmem:[#allocation17 + $0x4] sm:$0xf] %vm2144, %v2143
        // Predicated region
        $region113: #{tpu_custom_call.1} parent=63 // pred_check
          %p2147 = pneg %p314
        $region114: #{tpu_custom_call.1} parent=63 // pred_check_branch
          %2149 = sbr.rel (%p2147) target = $region116
        $region115: #{tpu_custom_call.1} parent=63 // pred_region
          %s2151 = ssub.s32 128, 128
          %2152 = vsyncadd [#allocation5], %s2151
          %s2153 = sshll.u32 [#allocation17], 4
          %s2154 = int_to_ptr.vmem [resolvable:$true] %s2153
          %2159 = dma.vmem_to_hbm [thread:$0]  %s2154, 128, %s11, [#allocation5], 64, 64, 4
        $region116: #{tpu_custom_call.1} parent=63 // pred_fallthru
          _
        // Predicated region
        $region117: #{tpu_custom_call.1} parent=63 // pred_check
          %p2160 = pneg %p314
        $region118: #{tpu_custom_call.1} parent=63 // pred_check_branch
          %2162 = sbr.rel (%p2160) target = $region120
        $region119: #{tpu_custom_call.1} parent=63 // pred_region
          %2163 = dma.done [#allocation5], 128
        $region120: #{tpu_custom_call.1} parent=63 // pred_fallthru
          _
      $region64: #{tpu_custom_call.1} parent=5 // pred_fallthru
        _
      %p2164 = scmp.le.s32.totalorder 2, %s20
      // Predicated region
      $region121: #{tpu_custom_call.1} parent=5 // pred_check
        %p2165 = pneg %p2164
      $region122: #{tpu_custom_call.1} parent=5 // pred_check_branch
        %2167 = sbr.rel (%p2165) target = $region124
      $region123: #{tpu_custom_call.1} parent=5 // pred_region
        %s2168 = ssub.s32 %s20, 2
      $region124: #{tpu_custom_call.1} parent=5 // pred_fallthru
        _
    $region6: #{tpu_custom_call.1} parent=1 // loop_footer
      %s24 = sadd.s32 1, %s20
    $region7: #{tpu_custom_call.1} parent=1 // loop_footer_branch
      %19 = sbr.rel target = $region3
    $region8: #{tpu_custom_call.1} parent=1 // loop_exit
      _
    %2169 = vsyncpa [#allocation4], 1
    %s2170 = scalar_lea.sflag [#allocation4], 1
    %2171 = vsyncpa %s2170, 1
    %2172 = vsyncpa [#allocation7], 1
    %2173 = vsyncpa [#allocation5], 1
    %s2174 = scalar_lea.sflag [#allocation5], 1
    %2175 = vsyncpa %s2174, 1

</llo_original>
